<compile_context>
chip_gen: v5e
topology: v5e:2x2
jax: 0.10.0
libtpu: 0.0.40
codegen_flags: <defaults>
</compile_context>

<pallas_src>
import functools

import jax
import jax.numpy as jnp
from jax import lax
from jax.experimental import pallas as pl
from jax.experimental.pallas import tpu as pltpu

EPS = 1e-5
LANE = 128
DEFAULT_ROW_TILE = 512
VMEM_LIMIT_BYTES = 48 * 1024 * 1024  # safe on v7x (64 MiB) and v5e/v6e (128 MiB)


def _round_up(x, m):
    return ((x + m - 1) // m) * m


def _row_tiling(m, row_tile):
    """Choose (padded_M, row_tile) so padded_M % row_tile == 0 and tile % 8 == 0."""
    if m >= row_tile:
        return _round_up(m, row_tile), row_tile
    tm = _round_up(m, 8)
    return tm, tm


def _compiler_params():
    return pltpu.CompilerParams(
        dimension_semantics=("parallel",),
        vmem_limit_bytes=VMEM_LIMIT_BYTES,
    )


# --------------------------------------------------------------------------
# Pallas kernels
# --------------------------------------------------------------------------
def _mm_stats_kernel(x_ref, w_ref, y_ref, psum_ref, psumsq_ref):
    # bf16 x bf16 -> f32 accumulation on the MXU.
    y = jnp.dot(x_ref[...], w_ref[...], preferred_element_type=jnp.float32)
    y_ref[...] = y
    # Per-tile partial statistics (zero-padded rows contribute exactly zero).
    psum_ref[...] = jnp.sum(y, axis=0, keepdims=True)[None]          # (1, 1, C)
    psumsq_ref[...] = jnp.sum(y * y, axis=0, keepdims=True)[None]    # (1, 1, C)


def _affine_kernel(y_ref, s_ref, t_ref, o_ref, *, relu):
    out = y_ref[...] * s_ref[...] + t_ref[...]
    if relu:
        out = jnp.maximum(out, 0.0)
    o_ref[...] = out.astype(o_ref.dtype)


def _affine_add_relu_kernel(y_ref, s_ref, t_ref, r_ref, rs_ref, rt_ref, o_ref):
    main = y_ref[...] * s_ref[...] + t_ref[...]
    res = r_ref[...].astype(jnp.float32) * rs_ref[...] + rt_ref[...]
    o_ref[...] = jnp.maximum(main + res, 0.0).astype(o_ref.dtype)


# --------------------------------------------------------------------------
# pallas_call wrappers
# --------------------------------------------------------------------------
def conv_bn_stats(x2d, w_p, gamma_p, beta_p, *, row_tile=DEFAULT_ROW_TILE):
    """Row-tiled matmul + BN batch-statistics.

    x2d:  (M, K) unpadded activations (any float dtype); zero rows/cols are
          appended here so padding never perturbs the batch statistics.
    w_p:  (Kp, Cp) bf16 weights, pre-padded to 128-lane multiples.
    Returns: y (Mp, Cp) f32, BN scale/shift (1, Cp) f32, Mp, tm.
    """
    m, k = x2d.shape
    kp, cp = w_p.shape
    assert k <= kp, (k, kp)
    mp, tm = _row_tiling(m, row_tile)
    n_tiles = mp // tm
    xp = jnp.pad(x2d.astype(jnp.bfloat16), ((0, mp - m), (0, kp - k)))

    y, psum, psumsq = pl.pallas_call(
        _mm_stats_kernel,
        out_shape=(
            jax.ShapeDtypeStruct((mp, cp), jnp.float32),
            jax.ShapeDtypeStruct((n_tiles, 1, cp), jnp.float32),
            jax.ShapeDtypeStruct((n_tiles, 1, cp), jnp.float32),
        ),
        grid=(n_tiles,),
        in_specs=[
            pl.BlockSpec((tm, kp), lambda i: (i, 0)),
            pl.BlockSpec((kp, cp), lambda i: (0, 0)),   # resident weights
        ],
        out_specs=(
            pl.BlockSpec((tm, cp), lambda i: (i, 0)),
            pl.BlockSpec((1, 1, cp), lambda i: (i, 0, 0)),
            pl.BlockSpec((1, 1, cp), lambda i: (i, 0, 0)),
        ),
        compiler_params=_compiler_params(),
    )(xp, w_p)

    # Tiny finalization of the global batch statistics (f32, clamped variance).
    total = jnp.sum(psum[:, 0, :], axis=0)
    total_sq = jnp.sum(psumsq[:, 0, :], axis=0)
    mean = total / m
    var = jnp.maximum(total_sq / m - mean * mean, 0.0)
    scale = gamma_p * lax.rsqrt(var + EPS)
    shift = beta_p - mean * scale
    return y, scale.reshape(1, cp), shift.reshape(1, cp), mp, tm


def apply_bn(y, scale, shift, *, tm, relu, out_dtype):
    mp, cp = y.shape
    n_tiles = mp // tm
    return pl.pallas_call(
        functools.partial(_affine_kernel, relu=relu),
        out_shape=jax.ShapeDtypeStruct((mp, cp), out_dtype),
        grid=(n_tiles,),
        in_specs=[
            pl.BlockSpec((tm, cp), lambda i: (i, 0)),
            pl.BlockSpec((1, cp), lambda i: (0, 0)),
            pl.BlockSpec((1, cp), lambda i: (0, 0)),
        ],
        out_specs=pl.BlockSpec((tm, cp), lambda i: (i, 0)),
        compiler_params=_compiler_params(),
    )(y, scale, shift)


def apply_bn_add_relu(y, scale, shift, res, rscale, rshift, *, tm,
                      out_dtype=jnp.float32):
    mp, cp = y.shape
    n_tiles = mp // tm
    return pl.pallas_call(
        _affine_add_relu_kernel,
        out_shape=jax.ShapeDtypeStruct((mp, cp), out_dtype),
        grid=(n_tiles,),
        in_specs=[
            pl.BlockSpec((tm, cp), lambda i: (i, 0)),
            pl.BlockSpec((1, cp), lambda i: (0, 0)),
            pl.BlockSpec((1, cp), lambda i: (0, 0)),
            pl.BlockSpec((tm, cp), lambda i: (i, 0)),   # residual tiled like out
            pl.BlockSpec((1, cp), lambda i: (0, 0)),
            pl.BlockSpec((1, cp), lambda i: (0, 0)),
        ],
        out_specs=pl.BlockSpec((tm, cp), lambda i: (i, 0)),
        compiler_params=_compiler_params(),
    )(y, scale, shift, res, rscale, rshift)


# --------------------------------------------------------------------------
# Glue: im2col patch extraction (layout plumbing; compute stays in kernels)
# --------------------------------------------------------------------------
def _im2col(x, k, stride, padding):
    n, h, w, c = x.shape
    xp = jnp.pad(x, ((0, 0), (padding, padding), (padding, padding), (0, 0)))
    ho = (h + 2 * padding - k) // stride + 1
    wo = (w + 2 * padding - k) // stride + 1
    cols = []
    for ki in range(k):
        for kj in range(k):
            cols.append(xp[:, ki:ki + (ho - 1) * stride + 1:stride,
                              kj:kj + (wo - 1) * stride + 1:stride, :])
    patches = jnp.concatenate(cols, axis=-1)          # (N, Ho, Wo, k*k*C)
    return patches.reshape(n * ho * wo, k * k * c), ho, wo


# --------------------------------------------------------------------------
# Parameter preparation (done once, outside the forward hot path)
# --------------------------------------------------------------------------
def prepare_params(params, *, kernel_size):
    mid, cin = params["w1"].shape[:2]
    cout = params["w3"].shape[0]
    k = kernel_size
    midp = _round_up(mid, LANE)
    cinp = _round_up(cin, LANE)
    coutp = _round_up(cout, LANE)
    k2p = _round_up(k * k * mid, LANE)

    def pad_w(w2d, kp, cp):
        kd, cd = w2d.shape
        return jnp.pad(w2d, ((0, kp - kd), (0, cp - cd))).astype(jnp.bfloat16)

    def pad_v(v, cp):
        return jnp.pad(v.astype(jnp.float32), (0, cp - v.shape[0]))

    prep = {
        "w1": pad_w(params["w1"].reshape(mid, cin).T, cinp, midp),
        "w2": pad_w(jnp.transpose(params["w2"], (2, 3, 1, 0)).reshape(k * k * mid, mid),
                    k2p, midp),
        "w3": pad_w(params["w3"].reshape(cout, mid).T, midp, coutp),
        "g1": pad_v(params["g1"], midp), "b1": pad_v(params["b1"], midp),
        "g2": pad_v(params["g2"], midp), "b2": pad_v(params["b2"], midp),
        "g3": pad_v(params["g3"], coutp), "b3": pad_v(params["b3"], coutp),
    }
    if "w_sc" in params:
        prep["w_sc"] = pad_w(params["w_sc"].reshape(cout, cin).T, cinp, coutp)
        prep["g_sc"] = pad_v(params["g_sc"], coutp)
        prep["b_sc"] = pad_v(params["b_sc"], coutp)
    return prep


# --------------------------------------------------------------------------
# Bottleneck forward
# --------------------------------------------------------------------------
def bottleneck_forward(x, prep, *, mid_channels, out_channels, kernel_size, stride,
                       row_tile=DEFAULT_ROW_TILE):
    """x: (N, H, W, Cin) float32, NHWC layout."""
    n, h, w, cin = x.shape
    k = kernel_size
    pad = k // 2
    mid = mid_channels
    cout = out_channels
    coutp = prep["w3"].shape[1]

    # ---- conv1 (1x1) + bn1 + relu ----
    m1 = n * h * w
    x_flat = x.reshape(m1, cin)
    y1, s1, t1, _, tm1 = conv_bn_stats(x_flat, prep["w1"], prep["g1"], prep["b1"],
                                       row_tile=row_tile)
    a1 = apply_bn(y1, s1, t1, tm=tm1, relu=True, out_dtype=jnp.bfloat16)
    a1 = a1[:m1, :mid].reshape(n, h, w, mid)

    # ---- conv2 (k x k, stride, padding=k//2) + bn2 + relu ----
    # TODO(synk): replace the materialized im2col with an in-kernel k*k tap
    # accumulation (needs offset/strided-window BlockSpecs); patches are kept in
    # bf16 to halve the extra HBM traffic in the meantime.
    patches, ho, wo = _im2col(a1, k, stride, pad)
    m2 = n * ho * wo
    y2, s2, t2, _, tm2 = conv_bn_stats(patches, prep["w2"], prep["g2"], prep["b2"],
                                       row_tile=row_tile)
    a2 = apply_bn(y2, s2, t2, tm=tm2, relu=True, out_dtype=jnp.bfloat16)
    a2 = a2[:m2]  # (m2, midp); padded lanes are exactly zero.

    # ---- conv3 (1x1) + bn3 (affine applied in the fused final kernel) ----
    y3, s3, t3, mp3, tm3 = conv_bn_stats(a2, prep["w3"], prep["g3"], prep["b3"],
                                         row_tile=row_tile)

    # ---- shortcut: identity, or 1x1 strided conv + bn ----
    x_s = x[:, ::stride, ::stride, :].reshape(m2, cin)
    if "w_sc" in prep:
        res, s_sc, t_sc, _, _ = conv_bn_stats(x_s, prep["w_sc"], prep["g_sc"],
                                              prep["b_sc"], row_tile=row_tile)
    else:
        res = jnp.pad(x_s.astype(jnp.float32), ((0, mp3 - m2), (0, coutp - cout)))
        s_sc = jnp.ones((1, coutp), jnp.float32)
        t_sc = jnp.zeros((1, coutp), jnp.float32)

    # ---- bn3 affine + shortcut affine + residual add + relu (one kernel) ----
    out = apply_bn_add_relu(y3, s3, t3, res, s_sc, t_sc, tm=tm3)
    return out[:m2, :cout].reshape(n, ho, wo, cout)


# --------------------------------------------------------------------------
# Deterministic parameter construction (mirrors nn.Module __init__ shapes)
# --------------------------------------------------------------------------
def make_params(key, in_channels, out_channels, kernel_size, stride):
    expansion = 4
    mid = out_channels // expansion
    k1, k2, k3, k4 = jax.random.split(key, 4)
    params = {
        "w1": 0.1 * jax.random.normal(k1, (mid, in_channels, 1, 1), jnp.float32),
        "w2": 0.1 * jax.random.normal(k2, (mid, mid, kernel_size, kernel_size), jnp.float32),
        "w3": 0.1 * jax.random.normal(k3, (out_channels, mid, 1, 1), jnp.float32),
        # BatchNorm affine params at PyTorch defaults (gamma=1, beta=0)
        "g1": jnp.ones((mid,), jnp.float32), "b1": jnp.zeros((mid,), jnp.float32),
        "g2": jnp.ones((mid,), jnp.float32), "b2": jnp.zeros((mid,), jnp.float32),
        "g3": jnp.ones((out_channels,), jnp.float32), "b3": jnp.zeros((out_channels,), jnp.float32),
    }
    if stride != 1 or in_channels != out_channels:
        params["w_sc"] = 0.1 * jax.random.normal(k4, (out_channels, in_channels, 1, 1), jnp.float32)
        params["g_sc"] = jnp.ones((out_channels,), jnp.float32)
        params["b_sc"] = jnp.zeros((out_channels,), jnp.float32)
    return params


if __name__ == "__main__":
    N, Cin, H, W = 2, 16, 16, 16
    Cout, ksize, stride = 32, 3, 2

    key = jax.random.PRNGKey(0)
    kx, kp = jax.random.split(key)
    # Build NCHW like PyTorch would see, then transpose to the kernel layout.
    x_nchw = jax.random.normal(kx, (N, Cin, H, W), jnp.float32)
    x_nhwc = jnp.transpose(x_nchw, (0, 2, 3, 1))

    params = make_params(kp, Cin, Cout, ksize, stride)
    prep = prepare_params(params, kernel_size=ksize)

    fwd = jax.jit(functools.partial(
        bottleneck_forward,
        mid_channels=Cout // 4, out_channels=Cout,
        kernel_size=ksize, stride=stride,
        row_tile=256))  # small tile so the test exercises a multi-tile grid

    out = jax.block_until_ready(fwd(x_nhwc, prep))

    expected_hw = (H + 2 * (ksize // 2) - ksize) // stride + 1
    assert out.shape == (N, expected_hw, expected_hw, Cout), out.shape
    assert bool(jnp.all(jnp.isfinite(out)))
    assert bool(jnp.all(out >= 0.0))  # final ReLU
    print("KERNEL_OK")
</pallas_src>

<mosaic_0001>
module attributes {stable_mosaic.version = 11 : i64} {
  func.func @_mm_stats_kernel(%arg0: i32, %arg1: memref<128x128xbf16, #tpu.memory_space<vmem>>, %arg2: memref<128x128xbf16, #tpu.memory_space<vmem>>, %arg3: memref<128x128xf32, #tpu.memory_space<vmem>>, %arg4: memref<1x1x128xf32, #tpu.memory_space<vmem>>, %arg5: memref<1x1x128xf32, #tpu.memory_space<vmem>>) attributes {dimension_semantics = [#tpu.dimension_semantics<parallel>], iteration_bounds = array<i64: 1>, scalar_prefetch = 0 : i64, scratch_operands = 0 : i64, tpu.core_type = #tpu.core_type<tc>, window_params = [{transform_indices = @transform_0, window_bounds = array<i64: 128, 128>}, {pipeline_mode = #tpu.pipeline_mode<synchronous>, transform_indices = @transform_1, window_bounds = array<i64: 128, 128>}, {transform_indices = @transform_2, window_bounds = array<i64: 128, 128>}, {transform_indices = @transform_3, window_bounds = array<i64: 1, 1, 128>}, {transform_indices = @transform_4, window_bounds = array<i64: 1, 1, 128>}]} {
    %c0 = arith.constant 0 : index
    %c0_0 = arith.constant 0 : index
    %0 = vector.load %arg1[%c0, %c0_0] : memref<128x128xbf16, #tpu.memory_space<vmem>>, vector<128x128xbf16>
    %c0_1 = arith.constant 0 : index
    %c0_2 = arith.constant 0 : index
    %1 = vector.load %arg2[%c0_1, %c0_2] : memref<128x128xbf16, #tpu.memory_space<vmem>>, vector<128x128xbf16>
    %cst = arith.constant dense<0.000000e+00> : vector<128x128xf32>
    %2 = tpu.matmul %0, %1, %cst {dimension_numbers = #tpu.dot_dimension_numbers<[1], [0], [0], [1], [0, 0, 1, 1], [], []>} : vector<128x128xbf16>, vector<128x128xbf16>, vector<128x128xf32> -> vector<128x128xf32>
    %c0_3 = arith.constant 0 : index
    %c0_4 = arith.constant 0 : index
    %3 = vector.load %arg3[%c0_3, %c0_4] : memref<128x128xf32, #tpu.memory_space<vmem>>, vector<128x128xf32>
    tpu.vector_store %arg3[%c0_3, %c0_4], %2 {strides = array<i32>} : memref<128x128xf32, #tpu.memory_space<vmem>>, vector<128x128xf32>,
    %cst_5 = arith.constant dense<0.000000e+00> : vector<128xf32>
    %4 = vector.multi_reduction <add>, %2, %cst_5 [0] : vector<128x128xf32> to vector<128xf32>
    %5 = vector.shape_cast %4 : vector<128xf32> to vector<1x128xf32>
    %6 = vector.shape_cast %5 : vector<1x128xf32> to vector<1x1x128xf32>
    %c0_6 = arith.constant 0 : index
    %c0_7 = arith.constant 0 : index
    %c0_8 = arith.constant 0 : index
    %7 = vector.load %arg4[%c0_6, %c0_7, %c0_8] : memref<1x1x128xf32, #tpu.memory_space<vmem>>, vector<1x1x128xf32>
    tpu.vector_store %arg4[%c0_6, %c0_7, %c0_8], %6 {strides = array<i32>} : memref<1x1x128xf32, #tpu.memory_space<vmem>>, vector<1x1x128xf32>,
    %8 = arith.mulf %2, %2 : vector<128x128xf32>
    %cst_9 = arith.constant dense<0.000000e+00> : vector<128xf32>
    %9 = vector.multi_reduction <add>, %8, %cst_9 [0] : vector<128x128xf32> to vector<128xf32>
    %10 = vector.shape_cast %9 : vector<128xf32> to vector<1x128xf32>
    %11 = vector.shape_cast %10 : vector<1x128xf32> to vector<1x1x128xf32>
    %c0_10 = arith.constant 0 : index
    %c0_11 = arith.constant 0 : index
    %c0_12 = arith.constant 0 : index
    %12 = vector.load %arg5[%c0_10, %c0_11, %c0_12] : memref<1x1x128xf32, #tpu.memory_space<vmem>>, vector<1x1x128xf32>
    tpu.vector_store %arg5[%c0_10, %c0_11, %c0_12], %11 {strides = array<i32>} : memref<1x1x128xf32, #tpu.memory_space<vmem>>, vector<1x1x128xf32>,
    return
  }
  func.func @transform_0(%arg0: i32) -> (i32, i32) {
    %c0_i32 = arith.constant 0 : i32
    %c0_i32_0 = arith.constant 0 : i32
    return %arg0, %c0_i32 : i32, i32
  }
  func.func @transform_1(%arg0: i32) -> (i32, i32) {
    %c0_i32 = arith.constant 0 : i32
    %c0_i32_0 = arith.constant 0 : i32
    %c0_i32_1 = arith.constant 0 : i32
    return %c0_i32, %c0_i32_0 : i32, i32
  }
  func.func @transform_2(%arg0: i32) -> (i32, i32) {
    %c0_i32 = arith.constant 0 : i32
    %c0_i32_0 = arith.constant 0 : i32
    return %arg0, %c0_i32 : i32, i32
  }
  func.func @transform_3(%arg0: i32) -> (i32, i32, i32) {
    %c0_i32 = arith.constant 0 : i32
    %c0_i32_0 = arith.constant 0 : i32
    %c0_i32_1 = arith.constant 0 : i32
    return %arg0, %c0_i32, %c0_i32_0 : i32, i32, i32
  }
  func.func @transform_4(%arg0: i32) -> (i32, i32, i32) {
    %c0_i32 = arith.constant 0 : i32
    %c0_i32_0 = arith.constant 0 : i32
    %c0_i32_1 = arith.constant 0 : i32
    return %arg0, %c0_i32, %c0_i32_0 : i32, i32, i32
  }
}

module attributes {stable_mosaic.version = 11 : i64} {
  func.func @_mm_stats_kernel(%arg0: i32, %arg1: memref<256x128xbf16, #tpu.memory_space<vmem>>, %arg2: memref<128x128xbf16, #tpu.memory_space<vmem>>, %arg3: memref<256x128xf32, #tpu.memory_space<vmem>>, %arg4: memref<1x1x128xf32, #tpu.memory_space<vmem>>, %arg5: memref<1x1x128xf32, #tpu.memory_space<vmem>>) attributes {dimension_semantics = [#tpu.dimension_semantics<parallel>], iteration_bounds = array<i64: 2>, scalar_prefetch = 0 : i64, scratch_operands = 0 : i64, tpu.core_type = #tpu.core_type<tc>, window_params = [{transform_indices = @transform_0, window_bounds = array<i64: 256, 128>}, {pipeline_mode = #tpu.pipeline_mode<synchronous>, transform_indices = @transform_1, window_bounds = array<i64: 128, 128>}, {transform_indices = @transform_2, window_bounds = array<i64: 256, 128>}, {transform_indices = @transform_3, window_bounds = array<i64: 1, 1, 128>}, {transform_indices = @transform_4, window_bounds = array<i64: 1, 1, 128>}]} {
    %c0 = arith.constant 0 : index
    %c0_0 = arith.constant 0 : index
    %0 = vector.load %arg1[%c0, %c0_0] : memref<256x128xbf16, #tpu.memory_space<vmem>>, vector<256x128xbf16>
    %c0_1 = arith.constant 0 : index
    %c0_2 = arith.constant 0 : index
    %1 = vector.load %arg2[%c0_1, %c0_2] : memref<128x128xbf16, #tpu.memory_space<vmem>>, vector<128x128xbf16>
    %cst = arith.constant dense<0.000000e+00> : vector<256x128xf32>
    %2 = tpu.matmul %0, %1, %cst {dimension_numbers = #tpu.dot_dimension_numbers<[1], [0], [0], [1], [0, 0, 1, 1], [], []>} : vector<256x128xbf16>, vector<128x128xbf16>, vector<256x128xf32> -> vector<256x128xf32>
    %c0_3 = arith.constant 0 : index
    %c0_4 = arith.constant 0 : index
    %3 = vector.load %arg3[%c0_3, %c0_4] : memref<256x128xf32, #tpu.memory_space<vmem>>, vector<256x128xf32>
    tpu.vector_store %arg3[%c0_3, %c0_4], %2 {strides = array<i32>} : memref<256x128xf32, #tpu.memory_space<vmem>>, vector<256x128xf32>,
    %cst_5 = arith.constant dense<0.000000e+00> : vector<128xf32>
    %4 = vector.multi_reduction <add>, %2, %cst_5 [0] : vector<256x128xf32> to vector<128xf32>
    %5 = vector.shape_cast %4 : vector<128xf32> to vector<1x128xf32>
    %6 = vector.shape_cast %5 : vector<1x128xf32> to vector<1x1x128xf32>
    %c0_6 = arith.constant 0 : index
    %c0_7 = arith.constant 0 : index
    %c0_8 = arith.constant 0 : index
    %7 = vector.load %arg4[%c0_6, %c0_7, %c0_8] : memref<1x1x128xf32, #tpu.memory_space<vmem>>, vector<1x1x128xf32>
    tpu.vector_store %arg4[%c0_6, %c0_7, %c0_8], %6 {strides = array<i32>} : memref<1x1x128xf32, #tpu.memory_space<vmem>>, vector<1x1x128xf32>,
    %8 = arith.mulf %2, %2 : vector<256x128xf32>
    %cst_9 = arith.constant dense<0.000000e+00> : vector<128xf32>
    %9 = vector.multi_reduction <add>, %8, %cst_9 [0] : vector<256x128xf32> to vector<128xf32>
    %10 = vector.shape_cast %9 : vector<128xf32> to vector<1x128xf32>
    %11 = vector.shape_cast %10 : vector<1x128xf32> to vector<1x1x128xf32>
    %c0_10 = arith.constant 0 : index
    %c0_11 = arith.constant 0 : index
    %c0_12 = arith.constant 0 : index
    %12 = vector.load %arg5[%c0_10, %c0_11, %c0_12] : memref<1x1x128xf32, #tpu.memory_space<vmem>>, vector<1x1x128xf32>
    tpu.vector_store %arg5[%c0_10, %c0_11, %c0_12], %11 {strides = array<i32>} : memref<1x1x128xf32, #tpu.memory_space<vmem>>, vector<1x1x128xf32>,
    return
  }
  func.func @transform_0(%arg0: i32) -> (i32, i32) {
    %c0_i32 = arith.constant 0 : i32
    %c0_i32_0 = arith.constant 0 : i32
    return %arg0, %c0_i32 : i32, i32
  }
  func.func @transform_1(%arg0: i32) -> (i32, i32) {
    %c0_i32 = arith.constant 0 : i32
    %c0_i32_0 = arith.constant 0 : i32
    %c0_i32_1 = arith.constant 0 : i32
    return %c0_i32, %c0_i32_0 : i32, i32
  }
  func.func @transform_2(%arg0: i32) -> (i32, i32) {
    %c0_i32 = arith.constant 0 : i32
    %c0_i32_0 = arith.constant 0 : i32
    return %arg0, %c0_i32 : i32, i32
  }
  func.func @transform_3(%arg0: i32) -> (i32, i32, i32) {
    %c0_i32 = arith.constant 0 : i32
    %c0_i32_0 = arith.constant 0 : i32
    %c0_i32_1 = arith.constant 0 : i32
    return %arg0, %c0_i32, %c0_i32_0 : i32, i32, i32
  }
  func.func @transform_4(%arg0: i32) -> (i32, i32, i32) {
    %c0_i32 = arith.constant 0 : i32
    %c0_i32_0 = arith.constant 0 : i32
    %c0_i32_1 = arith.constant 0 : i32
    return %arg0, %c0_i32, %c0_i32_0 : i32, i32, i32
  }
}

module attributes {stable_mosaic.version = 11 : i64} {
  func.func @_affine_kernel(%arg0: i32, %arg1: memref<256x128xf32, #tpu.memory_space<vmem>>, %arg2: memref<1x128xf32, #tpu.memory_space<vmem>>, %arg3: memref<1x128xf32, #tpu.memory_space<vmem>>, %arg4: memref<256x128xbf16, #tpu.memory_space<vmem>>) attributes {dimension_semantics = [#tpu.dimension_semantics<parallel>], iteration_bounds = array<i64: 2>, scalar_prefetch = 0 : i64, scratch_operands = 0 : i64, tpu.core_type = #tpu.core_type<tc>, window_params = [{transform_indices = @transform_0, window_bounds = array<i64: 256, 128>}, {pipeline_mode = #tpu.pipeline_mode<synchronous>, transform_indices = @transform_1, window_bounds = array<i64: 1, 128>}, {pipeline_mode = #tpu.pipeline_mode<synchronous>, transform_indices = @transform_2, window_bounds = array<i64: 1, 128>}, {transform_indices = @transform_3, window_bounds = array<i64: 256, 128>}]} {
    %c0 = arith.constant 0 : index
    %c0_0 = arith.constant 0 : index
    %0 = vector.load %arg1[%c0, %c0_0] : memref<256x128xf32, #tpu.memory_space<vmem>>, vector<256x128xf32>
    %c0_1 = arith.constant 0 : index
    %c0_2 = arith.constant 0 : index
    %1 = vector.load %arg2[%c0_1, %c0_2] : memref<1x128xf32, #tpu.memory_space<vmem>>, vector<1x128xf32>
    %2 = vector.broadcast %1 : vector<1x128xf32> to vector<256x128xf32>
    %3 = arith.mulf %0, %2 : vector<256x128xf32>
    %c0_3 = arith.constant 0 : index
    %c0_4 = arith.constant 0 : index
    %4 = vector.load %arg3[%c0_3, %c0_4] : memref<1x128xf32, #tpu.memory_space<vmem>>, vector<1x128xf32>
    %5 = vector.broadcast %4 : vector<1x128xf32> to vector<256x128xf32>
    %6 = arith.addf %3, %5 : vector<256x128xf32>
    %cst = arith.constant 0.000000e+00 : f32
    %7 = vector.broadcast %cst : f32 to vector<256x128xf32>
    %8 = arith.maximumf %6, %7 : vector<256x128xf32>
    %9 = arith.truncf %8 : vector<256x128xf32> to vector<256x128xbf16>
    %c0_5 = arith.constant 0 : index
    %c0_6 = arith.constant 0 : index
    %10 = vector.load %arg4[%c0_5, %c0_6] : memref<256x128xbf16, #tpu.memory_space<vmem>>, vector<256x128xbf16>
    tpu.vector_store %arg4[%c0_5, %c0_6], %9 {strides = array<i32>} : memref<256x128xbf16, #tpu.memory_space<vmem>>, vector<256x128xbf16>,
    return
  }
  func.func @transform_0(%arg0: i32) -> (i32, i32) {
    %c0_i32 = arith.constant 0 : i32
    %c0_i32_0 = arith.constant 0 : i32
    return %arg0, %c0_i32 : i32, i32
  }
  func.func @transform_1(%arg0: i32) -> (i32, i32) {
    %c0_i32 = arith.constant 0 : i32
    %c0_i32_0 = arith.constant 0 : i32
    %c0_i32_1 = arith.constant 0 : i32
    return %c0_i32, %c0_i32_0 : i32, i32
  }
  func.func @transform_2(%arg0: i32) -> (i32, i32) {
    %c0_i32 = arith.constant 0 : i32
    %c0_i32_0 = arith.constant 0 : i32
    %c0_i32_1 = arith.constant 0 : i32
    return %c0_i32, %c0_i32_0 : i32, i32
  }
  func.func @transform_3(%arg0: i32) -> (i32, i32) {
    %c0_i32 = arith.constant 0 : i32
    %c0_i32_0 = arith.constant 0 : i32
    return %arg0, %c0_i32 : i32, i32
  }
}

module attributes {stable_mosaic.version = 11 : i64} {
  func.func @_affine_kernel(%arg0: i32, %arg1: memref<128x128xf32, #tpu.memory_space<vmem>>, %arg2: memref<1x128xf32, #tpu.memory_space<vmem>>, %arg3: memref<1x128xf32, #tpu.memory_space<vmem>>, %arg4: memref<128x128xbf16, #tpu.memory_space<vmem>>) attributes {dimension_semantics = [#tpu.dimension_semantics<parallel>], iteration_bounds = array<i64: 1>, scalar_prefetch = 0 : i64, scratch_operands = 0 : i64, tpu.core_type = #tpu.core_type<tc>, window_params = [{transform_indices = @transform_0, window_bounds = array<i64: 128, 128>}, {pipeline_mode = #tpu.pipeline_mode<synchronous>, transform_indices = @transform_1, window_bounds = array<i64: 1, 128>}, {pipeline_mode = #tpu.pipeline_mode<synchronous>, transform_indices = @transform_2, window_bounds = array<i64: 1, 128>}, {transform_indices = @transform_3, window_bounds = array<i64: 128, 128>}]} {
    %c0 = arith.constant 0 : index
    %c0_0 = arith.constant 0 : index
    %0 = vector.load %arg1[%c0, %c0_0] : memref<128x128xf32, #tpu.memory_space<vmem>>, vector<128x128xf32>
    %c0_1 = arith.constant 0 : index
    %c0_2 = arith.constant 0 : index
    %1 = vector.load %arg2[%c0_1, %c0_2] : memref<1x128xf32, #tpu.memory_space<vmem>>, vector<1x128xf32>
    %2 = vector.broadcast %1 : vector<1x128xf32> to vector<128x128xf32>
    %3 = arith.mulf %0, %2 : vector<128x128xf32>
    %c0_3 = arith.constant 0 : index
    %c0_4 = arith.constant 0 : index
    %4 = vector.load %arg3[%c0_3, %c0_4] : memref<1x128xf32, #tpu.memory_space<vmem>>, vector<1x128xf32>
    %5 = vector.broadcast %4 : vector<1x128xf32> to vector<128x128xf32>
    %6 = arith.addf %3, %5 : vector<128x128xf32>
    %cst = arith.constant 0.000000e+00 : f32
    %7 = vector.broadcast %cst : f32 to vector<128x128xf32>
    %8 = arith.maximumf %6, %7 : vector<128x128xf32>
    %9 = arith.truncf %8 : vector<128x128xf32> to vector<128x128xbf16>
    %c0_5 = arith.constant 0 : index
    %c0_6 = arith.constant 0 : index
    %10 = vector.load %arg4[%c0_5, %c0_6] : memref<128x128xbf16, #tpu.memory_space<vmem>>, vector<128x128xbf16>
    tpu.vector_store %arg4[%c0_5, %c0_6], %9 {strides = array<i32>} : memref<128x128xbf16, #tpu.memory_space<vmem>>, vector<128x128xbf16>,
    return
  }
  func.func @transform_0(%arg0: i32) -> (i32, i32) {
    %c0_i32 = arith.constant 0 : i32
    %c0_i32_0 = arith.constant 0 : i32
    return %arg0, %c0_i32 : i32, i32
  }
  func.func @transform_1(%arg0: i32) -> (i32, i32) {
    %c0_i32 = arith.constant 0 : i32
    %c0_i32_0 = arith.constant 0 : i32
    %c0_i32_1 = arith.constant 0 : i32
    return %c0_i32, %c0_i32_0 : i32, i32
  }
  func.func @transform_2(%arg0: i32) -> (i32, i32) {
    %c0_i32 = arith.constant 0 : i32
    %c0_i32_0 = arith.constant 0 : i32
    %c0_i32_1 = arith.constant 0 : i32
    return %c0_i32, %c0_i32_0 : i32, i32
  }
  func.func @transform_3(%arg0: i32) -> (i32, i32) {
    %c0_i32 = arith.constant 0 : i32
    %c0_i32_0 = arith.constant 0 : i32
    return %arg0, %c0_i32 : i32, i32
  }
}

module attributes {stable_mosaic.version = 11 : i64} {
  func.func @_affine_add_relu_kernel(%arg0: i32, %arg1: memref<128x128xf32, #tpu.memory_space<vmem>>, %arg2: memref<1x128xf32, #tpu.memory_space<vmem>>, %arg3: memref<1x128xf32, #tpu.memory_space<vmem>>, %arg4: memref<128x128xf32, #tpu.memory_space<vmem>>, %arg5: memref<1x128xf32, #tpu.memory_space<vmem>>, %arg6: memref<1x128xf32, #tpu.memory_space<vmem>>, %arg7: memref<128x128xf32, #tpu.memory_space<vmem>>) attributes {dimension_semantics = [#tpu.dimension_semantics<parallel>], iteration_bounds = array<i64: 1>, scalar_prefetch = 0 : i64, scratch_operands = 0 : i64, tpu.core_type = #tpu.core_type<tc>, window_params = [{transform_indices = @transform_0, window_bounds = array<i64: 128, 128>}, {pipeline_mode = #tpu.pipeline_mode<synchronous>, transform_indices = @transform_1, window_bounds = array<i64: 1, 128>}, {pipeline_mode = #tpu.pipeline_mode<synchronous>, transform_indices = @transform_2, window_bounds = array<i64: 1, 128>}, {transform_indices = @transform_3, window_bounds = array<i64: 128, 128>}, {pipeline_mode = #tpu.pipeline_mode<synchronous>, transform_indices = @transform_4, window_bounds = array<i64: 1, 128>}, {pipeline_mode = #tpu.pipeline_mode<synchronous>, transform_indices = @transform_5, window_bounds = array<i64: 1, 128>}, {transform_indices = @transform_6, window_bounds = array<i64: 128, 128>}]} {
    %c0 = arith.constant 0 : index
    %c0_0 = arith.constant 0 : index
    %0 = vector.load %arg1[%c0, %c0_0] : memref<128x128xf32, #tpu.memory_space<vmem>>, vector<128x128xf32>
    %c0_1 = arith.constant 0 : index
    %c0_2 = arith.constant 0 : index
    %1 = vector.load %arg2[%c0_1, %c0_2] : memref<1x128xf32, #tpu.memory_space<vmem>>, vector<1x128xf32>
    %2 = vector.broadcast %1 : vector<1x128xf32> to vector<128x128xf32>
    %3 = arith.mulf %0, %2 : vector<128x128xf32>
    %c0_3 = arith.constant 0 : index
    %c0_4 = arith.constant 0 : index
    %4 = vector.load %arg3[%c0_3, %c0_4] : memref<1x128xf32, #tpu.memory_space<vmem>>, vector<1x128xf32>
    %5 = vector.broadcast %4 : vector<1x128xf32> to vector<128x128xf32>
    %6 = arith.addf %3, %5 : vector<128x128xf32>
    %c0_5 = arith.constant 0 : index
    %c0_6 = arith.constant 0 : index
    %7 = vector.load %arg4[%c0_5, %c0_6] : memref<128x128xf32, #tpu.memory_space<vmem>>, vector<128x128xf32>
    %c0_7 = arith.constant 0 : index
    %c0_8 = arith.constant 0 : index
    %8 = vector.load %arg5[%c0_7, %c0_8] : memref<1x128xf32, #tpu.memory_space<vmem>>, vector<1x128xf32>
    %9 = vector.broadcast %8 : vector<1x128xf32> to vector<128x128xf32>
    %10 = arith.mulf %7, %9 : vector<128x128xf32>
    %c0_9 = arith.constant 0 : index
    %c0_10 = arith.constant 0 : index
    %11 = vector.load %arg6[%c0_9, %c0_10] : memref<1x128xf32, #tpu.memory_space<vmem>>, vector<1x128xf32>
    %12 = vector.broadcast %11 : vector<1x128xf32> to vector<128x128xf32>
    %13 = arith.addf %10, %12 : vector<128x128xf32>
    %14 = arith.addf %6, %13 : vector<128x128xf32>
    %cst = arith.constant 0.000000e+00 : f32
    %15 = vector.broadcast %cst : f32 to vector<128x128xf32>
    %16 = arith.maximumf %14, %15 : vector<128x128xf32>
    %c0_11 = arith.constant 0 : index
    %c0_12 = arith.constant 0 : index
    %17 = vector.load %arg7[%c0_11, %c0_12] : memref<128x128xf32, #tpu.memory_space<vmem>>, vector<128x128xf32>
    tpu.vector_store %arg7[%c0_11, %c0_12], %16 {strides = array<i32>} : memref<128x128xf32, #tpu.memory_space<vmem>>, vector<128x128xf32>,
    return
  }
  func.func @transform_0(%arg0: i32) -> (i32, i32) {
    %c0_i32 = arith.constant 0 : i32
    %c0_i32_0 = arith.constant 0 : i32
    return %arg0, %c0_i32 : i32, i32
  }
  func.func @transform_1(%arg0: i32) -> (i32, i32) {
    %c0_i32 = arith.constant 0 : i32
    %c0_i32_0 = arith.constant 0 : i32
    %c0_i32_1 = arith.constant 0 : i32
    return %c0_i32, %c0_i32_0 : i32, i32
  }
  func.func @transform_2(%arg0: i32) -> (i32, i32) {
    %c0_i32 = arith.constant 0 : i32
    %c0_i32_0 = arith.constant 0 : i32
    %c0_i32_1 = arith.constant 0 : i32
    return %c0_i32, %c0_i32_0 : i32, i32
  }
  func.func @transform_3(%arg0: i32) -> (i32, i32) {
    %c0_i32 = arith.constant 0 : i32
    %c0_i32_0 = arith.constant 0 : i32
    return %arg0, %c0_i32 : i32, i32
  }
  func.func @transform_4(%arg0: i32) -> (i32, i32) {
    %c0_i32 = arith.constant 0 : i32
    %c0_i32_0 = arith.constant 0 : i32
    %c0_i32_1 = arith.constant 0 : i32
    return %c0_i32, %c0_i32_0 : i32, i32
  }
  func.func @transform_5(%arg0: i32) -> (i32, i32) {
    %c0_i32 = arith.constant 0 : i32
    %c0_i32_0 = arith.constant 0 : i32
    %c0_i32_1 = arith.constant 0 : i32
    return %c0_i32, %c0_i32_0 : i32, i32
  }
  func.func @transform_6(%arg0: i32) -> (i32, i32) {
    %c0_i32 = arith.constant 0 : i32
    %c0_i32_0 = arith.constant 0 : i32
    return %arg0, %c0_i32 : i32, i32
  }
}

</mosaic_0001>

<llo_original>
// kernel: bottleneck_forward.8
$region0: #{bottleneck_forward.8}
  #allocation0 [shape = 'u32[]', space=smem, size = 0x4, offset = 0x4, fixed_abs, tag = 'smem constant byte address 0x4 - core index']
  #allocation1 [shape = 'u32[72,128]{1,0:T(1,128)}', space=vmem, size = 0x9000, scoped, tag = 'internal scratch']
  %s0 = inlined_call_operand.vmem [shape: f32[512,128], index: 0, kind: input, shape index: {}]
  %s1 = inlined_call_operand.vmem [shape: f32[1,128], index: 1, kind: input, shape index: {}]
  %s2 = inlined_call_operand.vmem [shape: f32[1,128], index: 2, kind: input, shape index: {}]
  %s3 = inlined_call_operand.vmem [shape: bf16[512,128], index: 3, kind: output, shape index: {}]
  %s4 = sld [smem:[#allocation0]]
  $region45: #{bottleneck_forward.8} parent=0
    _
  %s6 = ssub.s32 1, %s4
  %s7 = scalar_select 0, %s6, %s4
  loop: start=0, step=1, limit=4
  $region2: #{bottleneck_forward.8} parent=0 // loop_pre_header
    _
  $region3: #{bottleneck_forward.8} parent=0 // loop_header
    %s9 = sphi 0, %s13
    %p10 = scmp.ge.s32.totalorder %s9, 4
    %s19 = sphi 0, %s21
    %s22 = sphi 0, %s19
    %s23 = sphi 0, %s22
    %s39 = sphi 0, %s23
    %s43 = sphi 0, %s43
    %s45 = sphi 0, %s43
    %s46 = sphi 0, %s45
    %s60 = sphi 0, %s46
    %s64 = sphi 0, %s64
    %s66 = sphi 0, %s64
    %s67 = sphi 0, %s66
    %s81 = sphi 0, %s67
    %s87 = sphi 0, %s89
    %s90 = sphi 0, %s87
    %s91 = sphi 0, %s90
    %s107 = sphi 0, %s91
  $region4: #{bottleneck_forward.8} parent=0 // loop_header_branch
    %12 = sbr.rel (%p10) target = $region8
  $region5: #{bottleneck_forward.8} parent=0 // loop_body
    %s14 = ssub.s32 %s9, 1
    %s15 = ssub.s32 %s9, 2
    %s16 = sadd.s32 %s9, 1
    %s17 = ssub.s32 %s9, %s16
    %p18 = scmp.eq.s32.totalorder %s17, 0
    %s20 = sadd.s32 %s19, 1
    %s21 = scalar_select %p18, %s19, %s20
    %p24 = pneg %p18
    %p25 = scmp.eq.s32.totalorder %s9, 1
    %p26 = por %p24, %p25
    %p27 = scmp.ne.s32.totalorder %s19, %s22
    %p28 = scmp.eq.s32.totalorder %s9, 0
    %p29 = por %p27, %p28
    %p30 = scmp.ne.s32.totalorder %s19, %s22
    %p31 = scmp.eq.s32.totalorder %s14, 1
    %p32 = por %p30, %p31
    %p33 = scmp.ne.s32.totalorder %s22, %s23
    %p34 = scmp.eq.s32.totalorder %s14, 0
    %p35 = por %p33, %p34
    %p36 = scmp.ne.s32.totalorder %s22, %s23
    %p37 = scmp.eq.s32.totalorder %s15, 1
    %p38 = por %p36, %p37
    %p40 = scmp.ne.s32.totalorder %s23, %s39
    %p41 = scmp.eq.s32.totalorder %s15, 0
    %p42 = por %p40, %p41
    %s44 = sadd.s32 %s43, 1
    %p47 = scmp.eq.s32.totalorder %s9, 1
    %p48 = scmp.ne.s32.totalorder %s43, %s45
    %p49 = scmp.eq.s32.totalorder %s9, 0
    %p50 = por %p48, %p49
    %p51 = scmp.ne.s32.totalorder %s43, %s45
    %p52 = scmp.eq.s32.totalorder %s14, 1
    %p53 = por %p51, %p52
    %p54 = scmp.ne.s32.totalorder %s45, %s46
    %p55 = scmp.eq.s32.totalorder %s14, 0
    %p56 = por %p54, %p55
    %p57 = scmp.ne.s32.totalorder %s45, %s46
    %p58 = scmp.eq.s32.totalorder %s15, 1
    %p59 = por %p57, %p58
    %p61 = scmp.ne.s32.totalorder %s46, %s60
    %p62 = scmp.eq.s32.totalorder %s15, 0
    %p63 = por %p61, %p62
    %s65 = sadd.s32 %s64, 1
    %p68 = scmp.eq.s32.totalorder %s9, 1
    %p69 = scmp.ne.s32.totalorder %s64, %s66
    %p70 = scmp.eq.s32.totalorder %s9, 0
    %p71 = por %p69, %p70
    %p72 = scmp.ne.s32.totalorder %s64, %s66
    %p73 = scmp.eq.s32.totalorder %s14, 1
    %p74 = por %p72, %p73
    %p75 = scmp.ne.s32.totalorder %s66, %s67
    %p76 = scmp.eq.s32.totalorder %s14, 0
    %p77 = por %p75, %p76
    %p78 = scmp.ne.s32.totalorder %s66, %s67
    %p79 = scmp.eq.s32.totalorder %s15, 1
    %p80 = por %p78, %p79
    %p82 = scmp.ne.s32.totalorder %s67, %s81
    %p83 = scmp.eq.s32.totalorder %s15, 0
    %p84 = por %p82, %p83
    %s85 = ssub.s32 %s9, %s16
    %p86 = scmp.eq.s32.totalorder %s85, 0
    %s88 = sadd.s32 %s87, 1
    %s89 = scalar_select %p86, %s87, %s88
    %p92 = pneg %p86
    %p93 = scmp.eq.s32.totalorder %s9, 1
    %p94 = por %p92, %p93
    %p95 = scmp.ne.s32.totalorder %s87, %s90
    %p96 = scmp.eq.s32.totalorder %s9, 0
    %p97 = por %p95, %p96
    %p98 = scmp.ne.s32.totalorder %s87, %s90
    %p99 = scmp.eq.s32.totalorder %s14, 1
    %p100 = por %p98, %p99
    %p101 = scmp.ne.s32.totalorder %s90, %s91
    %p102 = scmp.eq.s32.totalorder %s14, 0
    %p103 = por %p101, %p102
    %p104 = scmp.ne.s32.totalorder %s90, %s91
    %p105 = scmp.eq.s32.totalorder %s15, 1
    %p106 = por %p104, %p105
    %p108 = scmp.ne.s32.totalorder %s91, %s107
    %p109 = scmp.eq.s32.totalorder %s15, 0
    %p110 = por %p108, %p109
    %p111 = scmp.le.s32.totalorder 1, %s9
    %p112 = scmp.lt.s32.totalorder %s9, 3
    %p113 = pnand %p111, %p112
    %p114 = pneg %p113
    // Predicated region
    $region9: #{bottleneck_forward.8} parent=5 // pred_check
      _
    $region10: #{bottleneck_forward.8} parent=5 // pred_check_branch
      %116 = sbr.rel (%p113) target = $region12
    $region11: #{bottleneck_forward.8} parent=5 // pred_region
      %s117 = ssub.s32 %s9, 1
      // Predicated region
      $region13: #{bottleneck_forward.8} parent=11 // pred_check
        %p118 = pneg %p56
      $region14: #{bottleneck_forward.8} parent=11 // pred_check_branch
        %120 = sbr.rel (%p118) target = $region16
      $region15: #{bottleneck_forward.8} parent=11 // pred_region
        _
      $region16: #{bottleneck_forward.8} parent=11 // pred_fallthru
        _
      // Predicated region
      $region17: #{bottleneck_forward.8} parent=11 // pred_check
        %p121 = pneg %p77
      $region18: #{bottleneck_forward.8} parent=11 // pred_check_branch
        %123 = sbr.rel (%p121) target = $region20
      $region19: #{bottleneck_forward.8} parent=11 // pred_region
        _
      $region20: #{bottleneck_forward.8} parent=11 // pred_fallthru
        _
    $region12: #{bottleneck_forward.8} parent=5 // pred_fallthru
      _
    %p124 = scmp.lt.s32.totalorder %s9, 2
    // Predicated region
    $region21: #{bottleneck_forward.8} parent=5 // pred_check
      %p125 = pneg %p124
    $region22: #{bottleneck_forward.8} parent=5 // pred_check_branch
      %127 = sbr.rel (%p125) target = $region24
    $region23: #{bottleneck_forward.8} parent=5 // pred_region
      // Predicated region
      $region25: #{bottleneck_forward.8} parent=23 // pred_check
        %p128 = pneg %p29
      $region26: #{bottleneck_forward.8} parent=23 // pred_check_branch
        %130 = sbr.rel (%p128) target = $region28
      $region27: #{bottleneck_forward.8} parent=23 // pred_region
        %s131 = smul.u32 32, %s9
        %p132 = scmp.lt.s32.totalorder %s131, 63
        %s133 = scalar_select %p132, %s131, 63
        %s134 = smul.addr %s133, 8
        %s135 = scalar_lea.vmem %s0, %s134
        %s136 = smul.u32 32, %s9
      $region28: #{bottleneck_forward.8} parent=23 // pred_fallthru
        _
    $region24: #{bottleneck_forward.8} parent=5 // pred_fallthru
      _
    %p137 = scmp.le.s32.totalorder 1, %s9
    %p138 = scmp.lt.s32.totalorder %s9, 3
    %p139 = pnand %p137, %p138
    %p140 = pneg %p139
    // Predicated region
    $region29: #{bottleneck_forward.8} parent=5 // pred_check
      _
    $region30: #{bottleneck_forward.8} parent=5 // pred_check_branch
      %142 = sbr.rel (%p139) target = $region32
    $region31: #{bottleneck_forward.8} parent=5 // pred_region
      %s143 = ssub.s32 %s9, 1
      %s144 = smul.u32 32, %s14
      %p145 = scmp.lt.s32.totalorder %s144, 63
      %s146 = scalar_select %p145, %s144, 63
      %s147 = smul.addr %s146, 8
      %s148 = scalar_lea.vmem %s0, %s147
      %p149 = pneg %p35
      %p150 = pneg %p32
      %p151 = pneg %p56
      %p152 = pneg %p53
      %p153 = pneg %p77
      %p154 = pneg %p74
      %p155 = pneg %p103
      %p156 = pneg %p100
      %s157 = smul.u32 32, %s14
      %p158 = scmp.lt.s32.totalorder %s157, 63
      %s159 = scalar_select %p158, %s157, 63
      %s160 = smul.addr %s159, 4
      %s161 = scalar_lea.vmem %s3, %s160
      %s162 = smul.u32 32, %s14
      %p163 = scmp.lt.s32.totalorder %s162, 63
      %s164 = scalar_select %p163, %s162, 63
      %s165 = smul.addr %s164, 8
      %s166 = scalar_lea.vmem %s0, %s165
      %s167 = smul.u32 32, %s14
      %s168 = smul.u32 32, %s14
      %p169 = scmp.lt.s32.totalorder %s168, 63
      %s170 = scalar_select %p169, %s168, 63
      %s171 = smul.addr %s170, 4
      %s172 = scalar_lea.vmem %s3, %s171
      %s173 = smul.u32 32, %s14
      %v174 = vld [vmem:[%s166] sm:$0xff]
      %v175 = vld [vmem:[%s166 + $0x8] sm:$0xff]
      %v176 = vld [vmem:[%s166 + $0x10] sm:$0xff]
      %v177 = vld [vmem:[%s166 + $0x18] sm:$0xff]
      %v178 = vld [vmem:[%s166 + $0x20] sm:$0xff]
      %v179 = vld [vmem:[%s166 + $0x28] sm:$0xff]
      %v180 = vld [vmem:[%s166 + $0x30] sm:$0xff]
      %v181 = vld [vmem:[%s166 + $0x38] sm:$0xff]
      %v182 = vld [vmem:[%s166 + $0x40] sm:$0xff]
      %v183 = vld [vmem:[%s166 + $0x48] sm:$0xff]
      %v184 = vld [vmem:[%s166 + $0x50] sm:$0xff]
      %v185 = vld [vmem:[%s166 + $0x58] sm:$0xff]
      %v186 = vld [vmem:[%s166 + $0x60] sm:$0xff]
      %v187 = vld [vmem:[%s166 + $0x68] sm:$0xff]
      %v188 = vld [vmem:[%s166 + $0x70] sm:$0xff]
      %v189 = vld [vmem:[%s166 + $0x78] sm:$0xff]
      %v190 = vld [vmem:[%s166 + $0x80] sm:$0xff]
      %v191 = vld [vmem:[%s166 + $0x88] sm:$0xff]
      %v192 = vld [vmem:[%s166 + $0x90] sm:$0xff]
      %v193 = vld [vmem:[%s166 + $0x98] sm:$0xff]
      %v194 = vld [vmem:[%s166 + $0xa0] sm:$0xff]
      %v195 = vld [vmem:[%s166 + $0xa8] sm:$0xff]
      %v196 = vld [vmem:[%s166 + $0xb0] sm:$0xff]
      %v197 = vld [vmem:[%s166 + $0xb8] sm:$0xff]
      %v198 = vld [vmem:[%s166 + $0xc0] sm:$0xff]
      %v199 = vld [vmem:[%s166 + $0xc8] sm:$0xff]
      %v200 = vld [vmem:[%s166 + $0xd0] sm:$0xff]
      %v201 = vld [vmem:[%s166 + $0xd8] sm:$0xff]
      %v202 = vld [vmem:[%s166 + $0xe0] sm:$0xff]
      %v203 = vld [vmem:[%s166 + $0xe8] sm:$0xff]
      %v204 = vld [vmem:[%s166 + $0xf0] sm:$0xff]
      %v205 = vld [vmem:[%s166 + $0xf8] sm:$0xff]
      %v206 = vld [vmem:[%s1] sm:$0x1]
      %v208 = vperm.slane %v206, 0
      %v210 = vmul.f32 %v174, %v208
      %v211 = vmul.f32 %v175, %v208
      %v212 = vmul.f32 %v176, %v208
      %v213 = vmul.f32 %v177, %v208
      %v214 = vmul.f32 %v178, %v208
      %v215 = vmul.f32 %v179, %v208
      %v216 = vmul.f32 %v180, %v208
      %v217 = vmul.f32 %v181, %v208
      %v218 = vmul.f32 %v182, %v208
      %v219 = vmul.f32 %v183, %v208
      %v220 = vmul.f32 %v184, %v208
      %v221 = vmul.f32 %v185, %v208
      %v222 = vmul.f32 %v186, %v208
      %v223 = vmul.f32 %v187, %v208
      %v224 = vmul.f32 %v188, %v208
      %v225 = vmul.f32 %v189, %v208
      %v226 = vmul.f32 %v190, %v208
      %v227 = vmul.f32 %v191, %v208
      %v228 = vmul.f32 %v192, %v208
      %v229 = vmul.f32 %v193, %v208
      %v230 = vmul.f32 %v194, %v208
      %v231 = vmul.f32 %v195, %v208
      %v232 = vmul.f32 %v196, %v208
      %v233 = vmul.f32 %v197, %v208
      %v234 = vmul.f32 %v198, %v208
      %v235 = vmul.f32 %v199, %v208
      %v236 = vmul.f32 %v200, %v208
      %v237 = vmul.f32 %v201, %v208
      %v238 = vmul.f32 %v202, %v208
      %v239 = vmul.f32 %v203, %v208
      %v240 = vmul.f32 %v204, %v208
      %v241 = vmul.f32 %v205, %v208
      %v242 = vld [vmem:[%s2] sm:$0x1]
      %v244 = vperm.slane %v242, 0
      %v246 = vadd.f32 %v210, %v244
      %v247 = vadd.f32 %v211, %v244
      %v248 = vadd.f32 %v212, %v244
      %v249 = vadd.f32 %v213, %v244
      %v250 = vadd.f32 %v214, %v244
      %v251 = vadd.f32 %v215, %v244
      %v252 = vadd.f32 %v216, %v244
      %v253 = vadd.f32 %v217, %v244
      %v254 = vadd.f32 %v218, %v244
      %v255 = vadd.f32 %v219, %v244
      %v256 = vadd.f32 %v220, %v244
      %v257 = vadd.f32 %v221, %v244
      %v258 = vadd.f32 %v222, %v244
      %v259 = vadd.f32 %v223, %v244
      %v260 = vadd.f32 %v224, %v244
      %v261 = vadd.f32 %v225, %v244
      %v262 = vadd.f32 %v226, %v244
      %v263 = vadd.f32 %v227, %v244
      %v264 = vadd.f32 %v228, %v244
      %v265 = vadd.f32 %v229, %v244
      %v266 = vadd.f32 %v230, %v244
      %v267 = vadd.f32 %v231, %v244
      %v268 = vadd.f32 %v232, %v244
      %v269 = vadd.f32 %v233, %v244
      %v270 = vadd.f32 %v234, %v244
      %v271 = vadd.f32 %v235, %v244
      %v272 = vadd.f32 %v236, %v244
      %v273 = vadd.f32 %v237, %v244
      %v274 = vadd.f32 %v238, %v244
      %v275 = vadd.f32 %v239, %v244
      %v276 = vadd.f32 %v240, %v244
      %v277 = vadd.f32 %v241, %v244
      %v278 = vmax.f32 %v246, 0.0
      %v279 = vmax.f32 %v247, 0.0
      %v280 = vmax.f32 %v248, 0.0
      %v281 = vmax.f32 %v249, 0.0
      %v282 = vmax.f32 %v250, 0.0
      %v283 = vmax.f32 %v251, 0.0
      %v284 = vmax.f32 %v252, 0.0
      %v285 = vmax.f32 %v253, 0.0
      %v286 = vmax.f32 %v254, 0.0
      %v287 = vmax.f32 %v255, 0.0
      %v288 = vmax.f32 %v256, 0.0
      %v289 = vmax.f32 %v257, 0.0
      %v290 = vmax.f32 %v258, 0.0
      %v291 = vmax.f32 %v259, 0.0
      %v292 = vmax.f32 %v260, 0.0
      %v293 = vmax.f32 %v261, 0.0
      %v294 = vmax.f32 %v262, 0.0
      %v295 = vmax.f32 %v263, 0.0
      %v296 = vmax.f32 %v264, 0.0
      %v297 = vmax.f32 %v265, 0.0
      %v298 = vmax.f32 %v266, 0.0
      %v299 = vmax.f32 %v267, 0.0
      %v300 = vmax.f32 %v268, 0.0
      %v301 = vmax.f32 %v269, 0.0
      %v302 = vmax.f32 %v270, 0.0
      %v303 = vmax.f32 %v271, 0.0
      %v304 = vmax.f32 %v272, 0.0
      %v305 = vmax.f32 %v273, 0.0
      %v306 = vmax.f32 %v274, 0.0
      %v307 = vmax.f32 %v275, 0.0
      %v308 = vmax.f32 %v276, 0.0
      %v309 = vmax.f32 %v277, 0.0
      %v310 = vpack.c.bf16 %v278, %v278
      %v311 = vpack.c.bf16 %v279, %v279
      %v312 = vpack.c.bf16 %v280, %v280
      %v313 = vpack.c.bf16 %v281, %v281
      %v314 = vpack.c.bf16 %v282, %v282
      %v315 = vpack.c.bf16 %v283, %v283
      %v316 = vpack.c.bf16 %v284, %v284
      %v317 = vpack.c.bf16 %v285, %v285
      %v318 = vpack.c.bf16 %v286, %v286
      %v319 = vpack.c.bf16 %v287, %v287
      %v320 = vpack.c.bf16 %v288, %v288
      %v321 = vpack.c.bf16 %v289, %v289
      %v322 = vpack.c.bf16 %v290, %v290
      %v323 = vpack.c.bf16 %v291, %v291
      %v324 = vpack.c.bf16 %v292, %v292
      %v325 = vpack.c.bf16 %v293, %v293
      %v326 = vpack.c.bf16 %v294, %v294
      %v327 = vpack.c.bf16 %v295, %v295
      %v328 = vpack.c.bf16 %v296, %v296
      %v329 = vpack.c.bf16 %v297, %v297
      %v330 = vpack.c.bf16 %v298, %v298
      %v331 = vpack.c.bf16 %v299, %v299
      %v332 = vpack.c.bf16 %v300, %v300
      %v333 = vpack.c.bf16 %v301, %v301
      %v334 = vpack.c.bf16 %v302, %v302
      %v335 = vpack.c.bf16 %v303, %v303
      %v336 = vpack.c.bf16 %v304, %v304
      %v337 = vpack.c.bf16 %v305, %v305
      %v338 = vpack.c.bf16 %v306, %v306
      %v339 = vpack.c.bf16 %v307, %v307
      %v340 = vpack.c.bf16 %v308, %v308
      %v341 = vpack.c.bf16 %v309, %v309
      %342 = vst [vmem:[%s172] sm:$0xf] %v310
      %343 = vst [vmem:[%s172 + $0x4] sm:$0xf] %v311
      %344 = vst [vmem:[%s172 + $0x8] sm:$0xf] %v312
      %345 = vst [vmem:[%s172 + $0xc] sm:$0xf] %v313
      %346 = vst [vmem:[%s172 + $0x10] sm:$0xf] %v314
      %347 = vst [vmem:[%s172 + $0x14] sm:$0xf] %v315
      %348 = vst [vmem:[%s172 + $0x18] sm:$0xf] %v316
      %349 = vst [vmem:[%s172 + $0x1c] sm:$0xf] %v317
      %350 = vst [vmem:[%s172 + $0x20] sm:$0xf] %v318
      %351 = vst [vmem:[%s172 + $0x24] sm:$0xf] %v319
      %352 = vst [vmem:[%s172 + $0x28] sm:$0xf] %v320
      %353 = vst [vmem:[%s172 + $0x2c] sm:$0xf] %v321
      %354 = vst [vmem:[%s172 + $0x30] sm:$0xf] %v322
      %355 = vst [vmem:[%s172 + $0x34] sm:$0xf] %v323
      %356 = vst [vmem:[%s172 + $0x38] sm:$0xf] %v324
      %357 = vst [vmem:[%s172 + $0x3c] sm:$0xf] %v325
      %358 = vst [vmem:[%s172 + $0x40] sm:$0xf] %v326
      %359 = vst [vmem:[%s172 + $0x44] sm:$0xf] %v327
      %360 = vst [vmem:[%s172 + $0x48] sm:$0xf] %v328
      %361 = vst [vmem:[%s172 + $0x4c] sm:$0xf] %v329
      %362 = vst [vmem:[%s172 + $0x50] sm:$0xf] %v330
      %363 = vst [vmem:[%s172 + $0x54] sm:$0xf] %v331
      %364 = vst [vmem:[%s172 + $0x58] sm:$0xf] %v332
      %365 = vst [vmem:[%s172 + $0x5c] sm:$0xf] %v333
      %366 = vst [vmem:[%s172 + $0x60] sm:$0xf] %v334
      %367 = vst [vmem:[%s172 + $0x64] sm:$0xf] %v335
      %368 = vst [vmem:[%s172 + $0x68] sm:$0xf] %v336
      %369 = vst [vmem:[%s172 + $0x6c] sm:$0xf] %v337
      %370 = vst [vmem:[%s172 + $0x70] sm:$0xf] %v338
      %371 = vst [vmem:[%s172 + $0x74] sm:$0xf] %v339
      %372 = vst [vmem:[%s172 + $0x78] sm:$0xf] %v340
      %373 = vst [vmem:[%s172 + $0x7c] sm:$0xf] %v341
      %s374 = smul.u32 32, %s14
      %p375 = scmp.lt.s32.totalorder %s374, 63
      %s376 = scalar_select %p375, %s374, 63
      %s377 = smul.addr %s376, 4
      %s378 = scalar_lea.vmem %s3, %s377
      // Predicated region
      $region33: #{bottleneck_forward.8} parent=31 // pred_check
        %p379 = pneg %p100
      $region34: #{bottleneck_forward.8} parent=31 // pred_check_branch
        %381 = sbr.rel (%p379) target = $region36
      $region35: #{bottleneck_forward.8} parent=31 // pred_region
        %s382 = smul.u32 32, %s14
      $region36: #{bottleneck_forward.8} parent=31 // pred_fallthru
        _
    $region32: #{bottleneck_forward.8} parent=5 // pred_fallthru
      _
    %p383 = scmp.le.s32.totalorder 2, %s9
    // Predicated region
    $region37: #{bottleneck_forward.8} parent=5 // pred_check
      %p384 = pneg %p383
    $region38: #{bottleneck_forward.8} parent=5 // pred_check_branch
      %386 = sbr.rel (%p384) target = $region40
    $region39: #{bottleneck_forward.8} parent=5 // pred_region
      %s387 = ssub.s32 %s9, 2
      // Predicated region
      $region41: #{bottleneck_forward.8} parent=39 // pred_check
        %p388 = pneg %p106
      $region42: #{bottleneck_forward.8} parent=39 // pred_check_branch
        %390 = sbr.rel (%p388) target = $region44
      $region43: #{bottleneck_forward.8} parent=39 // pred_region
        %s391 = smul.u32 32, %s15
        %p392 = scmp.lt.s32.totalorder %s391, 63
        %s393 = scalar_select %p392, %s391, 63
        %s394 = smul.addr %s393, 4
        %s395 = scalar_lea.vmem %s3, %s394
      $region44: #{bottleneck_forward.8} parent=39 // pred_fallthru
        _
    $region40: #{bottleneck_forward.8} parent=5 // pred_fallthru
      _
  $region6: #{bottleneck_forward.8} parent=0 // loop_footer
    %s13 = sadd.s32 1, %s9
  $region7: #{bottleneck_forward.8} parent=0 // loop_footer_branch
    %8 = sbr.rel target = $region3
  $region8: #{bottleneck_forward.8} parent=0 // loop_exit
    _

// kernel: bottleneck_forward.12
$region0: #{bottleneck_forward.12}
  #allocation0 [shape = 'u32[]', space=smem, size = 0x4, offset = 0x4, fixed_abs, tag = 'smem constant byte address 0x4 - core index']
  #allocation1 [shape = 'u32[72,128]{1,0:T(1,128)}', space=vmem, size = 0x9000, scoped, tag = 'internal scratch']
  %s0 = inlined_call_operand.vmem [shape: bf16[128,128], index: 0, kind: input, shape index: {}]
  %s1 = inlined_call_operand.vmem [shape: bf16[128,128], index: 1, kind: input, shape index: {}]
  %s2 = inlined_call_operand.vmem [shape: f32[128,128], index: 2, kind: output, shape index: {0}]
  %s3 = inlined_call_operand.vmem [shape: f32[1,1,128], index: 3, kind: output, shape index: {1}]
  %s4 = inlined_call_operand.vmem [shape: f32[1,1,128], index: 4, kind: output, shape index: {2}]
  %5 = xla_tuple %s2, %s3, %s4
  %s6 = sld [smem:[#allocation0]]
  $region34: #{bottleneck_forward.12} parent=0
    _
  %s8 = ssub.s32 1, %s6
  %s9 = scalar_select 0, %s8, %s6
  // Predicated region
  $region2: #{bottleneck_forward.12} parent=0 // pred_check
    _
  $region3: #{bottleneck_forward.12} parent=0 // pred_check_branch
    %11 = sbr.rel (0) target = $region5
  $region4: #{bottleneck_forward.12} parent=0 // pred_region
    _
  $region5: #{bottleneck_forward.12} parent=0 // pred_fallthru
    _
  // Predicated region
  $region6: #{bottleneck_forward.12} parent=0 // pred_check
    _
  $region7: #{bottleneck_forward.12} parent=0 // pred_check_branch
    %13 = sbr.rel (0) target = $region9
  $region8: #{bottleneck_forward.12} parent=0 // pred_region
    _
  $region9: #{bottleneck_forward.12} parent=0 // pred_fallthru
    _
  %v14 = vld [vmem:[%s0] sm:$0xf]
  %v15 = vld [vmem:[%s0 + $0x4] sm:$0xf]
  %v16 = vld [vmem:[%s0 + $0x8] sm:$0xf]
  %v17 = vld [vmem:[%s0 + $0xc] sm:$0xf]
  %v18 = vld [vmem:[%s0 + $0x10] sm:$0xf]
  %v19 = vld [vmem:[%s0 + $0x14] sm:$0xf]
  %v20 = vld [vmem:[%s0 + $0x18] sm:$0xf]
  %v21 = vld [vmem:[%s0 + $0x1c] sm:$0xf]
  %v22 = vld [vmem:[%s0 + $0x20] sm:$0xf]
  %v23 = vld [vmem:[%s0 + $0x24] sm:$0xf]
  %v24 = vld [vmem:[%s0 + $0x28] sm:$0xf]
  %v25 = vld [vmem:[%s0 + $0x2c] sm:$0xf]
  %v26 = vld [vmem:[%s0 + $0x30] sm:$0xf]
  %v27 = vld [vmem:[%s0 + $0x34] sm:$0xf]
  %v28 = vld [vmem:[%s0 + $0x38] sm:$0xf]
  %v29 = vld [vmem:[%s0 + $0x3c] sm:$0xf]
  %v30 = vld [vmem:[%s1] sm:$0xf]
  %v31 = vld [vmem:[%s1 + $0x4] sm:$0xf]
  %v32 = vld [vmem:[%s1 + $0x8] sm:$0xf]
  %v33 = vld [vmem:[%s1 + $0xc] sm:$0xf]
  %v34 = vld [vmem:[%s1 + $0x10] sm:$0xf]
  %v35 = vld [vmem:[%s1 + $0x14] sm:$0xf]
  %v36 = vld [vmem:[%s1 + $0x18] sm:$0xf]
  %v37 = vld [vmem:[%s1 + $0x1c] sm:$0xf]
  %v38 = vld [vmem:[%s1 + $0x20] sm:$0xf]
  %v39 = vld [vmem:[%s1 + $0x24] sm:$0xf]
  %v40 = vld [vmem:[%s1 + $0x28] sm:$0xf]
  %v41 = vld [vmem:[%s1 + $0x2c] sm:$0xf]
  %v42 = vld [vmem:[%s1 + $0x30] sm:$0xf]
  %v43 = vld [vmem:[%s1 + $0x34] sm:$0xf]
  %v44 = vld [vmem:[%s1 + $0x38] sm:$0xf]
  %v45 = vld [vmem:[%s1 + $0x3c] sm:$0xf]
  %v62 = vunpack.c.l.b16 %v14
  %v63 = vunpack.c.l.b16 %v15
  %v64 = vunpack.c.l.b16 %v16
  %v65 = vunpack.c.l.b16 %v17
  %v66 = vunpack.c.l.b16 %v18
  %v67 = vunpack.c.l.b16 %v19
  %v68 = vunpack.c.l.b16 %v20
  %v69 = vunpack.c.l.b16 %v21
  %v70 = vunpack.c.l.b16 %v22
  %v71 = vunpack.c.l.b16 %v23
  %v72 = vunpack.c.l.b16 %v24
  %v73 = vunpack.c.l.b16 %v25
  %v74 = vunpack.c.l.b16 %v26
  %v75 = vunpack.c.l.b16 %v27
  %v76 = vunpack.c.l.b16 %v28
  %v77 = vunpack.c.l.b16 %v29
  %v78 = vpack.c.b16 %v63, %v62
  %v79 = vpack.c.b16 %v65, %v64
  %v80 = vpack.c.b16 %v67, %v66
  %v81 = vpack.c.b16 %v69, %v68
  %v82 = vpack.c.b16 %v71, %v70
  %v83 = vpack.c.b16 %v73, %v72
  %v84 = vpack.c.b16 %v75, %v74
  %v85 = vpack.c.b16 %v77, %v76
  %v110 = vunpack.c.l.b16 %v30
  %v111 = vunpack.c.l.b16 %v31
  %v112 = vunpack.c.l.b16 %v32
  %v113 = vunpack.c.l.b16 %v33
  %v114 = vunpack.c.l.b16 %v34
  %v115 = vunpack.c.l.b16 %v35
  %v116 = vunpack.c.l.b16 %v36
  %v117 = vunpack.c.l.b16 %v37
  %v118 = vunpack.c.l.b16 %v38
  %v119 = vunpack.c.l.b16 %v39
  %v120 = vunpack.c.l.b16 %v40
  %v121 = vunpack.c.l.b16 %v41
  %v122 = vunpack.c.l.b16 %v42
  %v123 = vunpack.c.l.b16 %v43
  %v124 = vunpack.c.l.b16 %v44
  %v125 = vunpack.c.l.b16 %v45
  %v126 = vpack.c.b16 %v111, %v110
  %v127 = vpack.c.b16 %v113, %v112
  %v128 = vpack.c.b16 %v115, %v114
  %v129 = vpack.c.b16 %v117, %v116
  %v130 = vpack.c.b16 %v119, %v118
  %v131 = vpack.c.b16 %v121, %v120
  %v132 = vpack.c.b16 %v123, %v122
  %v133 = vpack.c.b16 %v125, %v124
  %142 = vmatpush.bf16.msra.mxu0 %v133
  %143 = vmatpush.bf16.msra.mxu0 %v132
  %144 = vmatpush.bf16.msra.mxu0 %v131
  %145 = vmatpush.bf16.msra.mxu0 %v130
  %146 = vmatpush.bf16.msra.mxu0 %v129
  %147 = vmatpush.bf16.msra.mxu0 %v128
  %148 = vmatpush.bf16.msra.mxu0 %v127
  %149 = vmatpush.bf16.msra.mxu0 %v126
  %150 = vmatmul.bf16.gmra.mxu0 %v78
  %v151 = vpop.f32.mrf.mxu0
  %v152 = vadd.f32 0.0, %v151
  %v153 = vpop.f32.mrf.mxu0
  %v154 = vadd.f32 0.0, %v153
  %155 = vmatmul.bf16.gmra.mxu0 %v79
  %v156 = vpop.f32.mrf.mxu0
  %v157 = vadd.f32 0.0, %v156
  %v158 = vpop.f32.mrf.mxu0
  %v159 = vadd.f32 0.0, %v158
  %160 = vmatmul.bf16.gmra.mxu0 %v80
  %v161 = vpop.f32.mrf.mxu0
  %v162 = vadd.f32 0.0, %v161
  %v163 = vpop.f32.mrf.mxu0
  %v164 = vadd.f32 0.0, %v163
  %165 = vmatmul.bf16.gmra.mxu0 %v81
  %v166 = vpop.f32.mrf.mxu0
  %v167 = vadd.f32 0.0, %v166
  %v168 = vpop.f32.mrf.mxu0
  %v169 = vadd.f32 0.0, %v168
  %170 = vmatmul.bf16.gmra.mxu0 %v82
  %v171 = vpop.f32.mrf.mxu0
  %v172 = vadd.f32 0.0, %v171
  %v173 = vpop.f32.mrf.mxu0
  %v174 = vadd.f32 0.0, %v173
  %175 = vmatmul.bf16.gmra.mxu0 %v83
  %v176 = vpop.f32.mrf.mxu0
  %v177 = vadd.f32 0.0, %v176
  %v178 = vpop.f32.mrf.mxu0
  %v179 = vadd.f32 0.0, %v178
  %180 = vmatmul.bf16.gmra.mxu0 %v84
  %v181 = vpop.f32.mrf.mxu0
  %v182 = vadd.f32 0.0, %v181
  %v183 = vpop.f32.mrf.mxu0
  %v184 = vadd.f32 0.0, %v183
  %185 = vmatmul.bf16.gmra.mxu0 %v85
  %v186 = vpop.f32.mrf.mxu0
  %v187 = vadd.f32 0.0, %v186
  %v188 = vpop.f32.mrf.mxu0
  %v189 = vadd.f32 0.0, %v188
  %190 = vdwg.mxu0
  %191 = vst [vmem:[%s2] sm:$0xff] %v152
  %192 = vst [vmem:[%s2 + $0x8] sm:$0xff] %v154
  %193 = vst [vmem:[%s2 + $0x10] sm:$0xff] %v157
  %194 = vst [vmem:[%s2 + $0x18] sm:$0xff] %v159
  %195 = vst [vmem:[%s2 + $0x20] sm:$0xff] %v162
  %196 = vst [vmem:[%s2 + $0x28] sm:$0xff] %v164
  %197 = vst [vmem:[%s2 + $0x30] sm:$0xff] %v167
  %198 = vst [vmem:[%s2 + $0x38] sm:$0xff] %v169
  %199 = vst [vmem:[%s2 + $0x40] sm:$0xff] %v172
  %200 = vst [vmem:[%s2 + $0x48] sm:$0xff] %v174
  %201 = vst [vmem:[%s2 + $0x50] sm:$0xff] %v177
  %202 = vst [vmem:[%s2 + $0x58] sm:$0xff] %v179
  %203 = vst [vmem:[%s2 + $0x60] sm:$0xff] %v182
  %204 = vst [vmem:[%s2 + $0x68] sm:$0xff] %v184
  %205 = vst [vmem:[%s2 + $0x70] sm:$0xff] %v187
  %206 = vst [vmem:[%s2 + $0x78] sm:$0xff] %v189
  %v207 = vadd.f32 %v152, %v154
  %v208 = vadd.f32 %v207, %v157
  %v209 = vadd.f32 %v208, %v159
  %v210 = vadd.f32 %v209, %v162
  %v211 = vadd.f32 %v210, %v164
  %v212 = vadd.f32 %v211, %v167
  %v213 = vadd.f32 %v212, %v169
  %v214 = vadd.f32 %v213, %v172
  %v215 = vadd.f32 %v214, %v174
  %v216 = vadd.f32 %v215, %v177
  %v217 = vadd.f32 %v216, %v179
  %v218 = vadd.f32 %v217, %v182
  %v219 = vadd.f32 %v218, %v184
  %v220 = vadd.f32 %v219, %v187
  %v221 = vadd.f32 %v220, %v189
  %v222 = vrot.slane %v221, 4
  %v223 = vadd.f32 %v221, %v222
  %v224 = vrot.slane %v223, 2
  %v225 = vadd.f32 %v223, %v224
  %v226 = vrot.slane %v225, 1
  %v227 = vadd.f32 %v225, %v226
  %228 = vst [vmem:[%s3] sm:$0x1] %v227
  %v229 = vmul.f32 %v152, %v152
  %v230 = vmul.f32 %v154, %v154
  %v231 = vmul.f32 %v157, %v157
  %v232 = vmul.f32 %v159, %v159
  %v233 = vmul.f32 %v162, %v162
  %v234 = vmul.f32 %v164, %v164
  %v235 = vmul.f32 %v167, %v167
  %v236 = vmul.f32 %v169, %v169
  %v237 = vmul.f32 %v172, %v172
  %v238 = vmul.f32 %v174, %v174
  %v239 = vmul.f32 %v177, %v177
  %v240 = vmul.f32 %v179, %v179
  %v241 = vmul.f32 %v182, %v182
  %v242 = vmul.f32 %v184, %v184
  %v243 = vmul.f32 %v187, %v187
  %v244 = vmul.f32 %v189, %v189
  %v245 = vadd.f32 %v229, %v230
  %v246 = vadd.f32 %v245, %v231
  %v247 = vadd.f32 %v246, %v232
  %v248 = vadd.f32 %v247, %v233
  %v249 = vadd.f32 %v248, %v234
  %v250 = vadd.f32 %v249, %v235
  %v251 = vadd.f32 %v250, %v236
  %v252 = vadd.f32 %v251, %v237
  %v253 = vadd.f32 %v252, %v238
  %v254 = vadd.f32 %v253, %v239
  %v255 = vadd.f32 %v254, %v240
  %v256 = vadd.f32 %v255, %v241
  %v257 = vadd.f32 %v256, %v242
  %v258 = vadd.f32 %v257, %v243
  %v259 = vadd.f32 %v258, %v244
  %v260 = vrot.slane %v259, 4
  %v261 = vadd.f32 %v259, %v260
  %v262 = vrot.slane %v261, 2
  %v263 = vadd.f32 %v261, %v262
  %v264 = vrot.slane %v263, 1
  %v265 = vadd.f32 %v263, %v264
  %266 = vst [vmem:[%s4] sm:$0x1] %v265
  // Predicated region
  $region10: #{bottleneck_forward.12} parent=0 // pred_check
    _
  $region11: #{bottleneck_forward.12} parent=0 // pred_check_branch
    %268 = sbr.rel (0) target = $region13
  $region12: #{bottleneck_forward.12} parent=0 // pred_region
    _
  $region13: #{bottleneck_forward.12} parent=0 // pred_fallthru
    _
  // Predicated region
  $region14: #{bottleneck_forward.12} parent=0 // pred_check
    _
  $region15: #{bottleneck_forward.12} parent=0 // pred_check_branch
    %270 = sbr.rel (0) target = $region17
  $region16: #{bottleneck_forward.12} parent=0 // pred_region
    _
  $region17: #{bottleneck_forward.12} parent=0 // pred_fallthru
    _
  // Predicated region
  $region18: #{bottleneck_forward.12} parent=0 // pred_check
    _
  $region19: #{bottleneck_forward.12} parent=0 // pred_check_branch
    %272 = sbr.rel (0) target = $region21
  $region20: #{bottleneck_forward.12} parent=0 // pred_region
    _
  $region21: #{bottleneck_forward.12} parent=0 // pred_fallthru
    _
  // Predicated region
  $region22: #{bottleneck_forward.12} parent=0 // pred_check
    _
  $region23: #{bottleneck_forward.12} parent=0 // pred_check_branch
    %274 = sbr.rel (0) target = $region25
  $region24: #{bottleneck_forward.12} parent=0 // pred_region
    _
  $region25: #{bottleneck_forward.12} parent=0 // pred_fallthru
    _
  // Predicated region
  $region26: #{bottleneck_forward.12} parent=0 // pred_check
    _
  $region27: #{bottleneck_forward.12} parent=0 // pred_check_branch
    %276 = sbr.rel (0) target = $region29
  $region28: #{bottleneck_forward.12} parent=0 // pred_region
    _
  $region29: #{bottleneck_forward.12} parent=0 // pred_fallthru
    _
  // Predicated region
  $region30: #{bottleneck_forward.12} parent=0 // pred_check
    _
  $region31: #{bottleneck_forward.12} parent=0 // pred_check_branch
    %278 = sbr.rel (0) target = $region33
  $region32: #{bottleneck_forward.12} parent=0 // pred_region
    _
  $region33: #{bottleneck_forward.12} parent=0 // pred_fallthru
    _

// kernel: bottleneck_forward.7
$region0: #{bottleneck_forward.7}
  #allocation0 [shape = 'u32[]', space=smem, size = 0x4, offset = 0x4, fixed_abs, tag = 'smem constant byte address 0x4 - core index']
  #allocation1 [shape = 'u32[72,128]{1,0:T(1,128)}', space=vmem, size = 0x9000, scoped, tag = 'internal scratch']
  %s0 = inlined_call_operand.vmem [shape: bf16[512,128], index: 0, kind: input, shape index: {}]
  %s1 = inlined_call_operand.vmem [shape: bf16[128,128], index: 1, kind: input, shape index: {}]
  %s2 = inlined_call_operand.vmem [shape: f32[512,128], index: 2, kind: output, shape index: {0}]
  %s3 = inlined_call_operand.vmem [shape: f32[2,1,128], index: 3, kind: output, shape index: {1}]
  %s4 = inlined_call_operand.vmem [shape: f32[2,1,128], index: 4, kind: output, shape index: {2}]
  %5 = xla_tuple %s2, %s3, %s4
  %s6 = sld [smem:[#allocation0]]
  $region57: #{bottleneck_forward.7} parent=0
    _
  %s8 = ssub.s32 1, %s6
  %s9 = scalar_select 0, %s8, %s6
  loop: start=0, step=1, limit=4
  $region2: #{bottleneck_forward.7} parent=0 // loop_pre_header
    _
  $region3: #{bottleneck_forward.7} parent=0 // loop_header
    %s11 = sphi 0, %s15
    %p12 = scmp.ge.s32.totalorder %s11, 4
    %s21 = sphi 0, %s23
    %s24 = sphi 0, %s21
    %s25 = sphi 0, %s24
    %s41 = sphi 0, %s25
    %s45 = sphi 0, %s45
    %s47 = sphi 0, %s45
    %s48 = sphi 0, %s47
    %s62 = sphi 0, %s48
    %s68 = sphi 0, %s70
    %s71 = sphi 0, %s68
    %s72 = sphi 0, %s71
    %s88 = sphi 0, %s72
    %s94 = sphi 0, %s96
    %s97 = sphi 0, %s94
    %s98 = sphi 0, %s97
    %s114 = sphi 0, %s98
    %s120 = sphi 0, %s122
    %s123 = sphi 0, %s120
    %s124 = sphi 0, %s123
    %s140 = sphi 0, %s124
  $region4: #{bottleneck_forward.7} parent=0 // loop_header_branch
    %14 = sbr.rel (%p12) target = $region8
  $region5: #{bottleneck_forward.7} parent=0 // loop_body
    %s16 = ssub.s32 %s11, 1
    %s17 = ssub.s32 %s11, 2
    %s18 = sadd.s32 %s11, 1
    %s19 = ssub.s32 %s11, %s18
    %p20 = scmp.eq.s32.totalorder %s19, 0
    %s22 = sadd.s32 %s21, 1
    %s23 = scalar_select %p20, %s21, %s22
    %p26 = pneg %p20
    %p27 = scmp.eq.s32.totalorder %s11, 1
    %p28 = por %p26, %p27
    %p29 = scmp.ne.s32.totalorder %s21, %s24
    %p30 = scmp.eq.s32.totalorder %s11, 0
    %p31 = por %p29, %p30
    %p32 = scmp.ne.s32.totalorder %s21, %s24
    %p33 = scmp.eq.s32.totalorder %s16, 1
    %p34 = por %p32, %p33
    %p35 = scmp.ne.s32.totalorder %s24, %s25
    %p36 = scmp.eq.s32.totalorder %s16, 0
    %p37 = por %p35, %p36
    %p38 = scmp.ne.s32.totalorder %s24, %s25
    %p39 = scmp.eq.s32.totalorder %s17, 1
    %p40 = por %p38, %p39
    %p42 = scmp.ne.s32.totalorder %s25, %s41
    %p43 = scmp.eq.s32.totalorder %s17, 0
    %p44 = por %p42, %p43
    %s46 = sadd.s32 %s45, 1
    %p49 = scmp.eq.s32.totalorder %s11, 1
    %p50 = scmp.ne.s32.totalorder %s45, %s47
    %p51 = scmp.eq.s32.totalorder %s11, 0
    %p52 = por %p50, %p51
    %p53 = scmp.ne.s32.totalorder %s45, %s47
    %p54 = scmp.eq.s32.totalorder %s16, 1
    %p55 = por %p53, %p54
    %p56 = scmp.ne.s32.totalorder %s47, %s48
    %p57 = scmp.eq.s32.totalorder %s16, 0
    %p58 = por %p56, %p57
    %p59 = scmp.ne.s32.totalorder %s47, %s48
    %p60 = scmp.eq.s32.totalorder %s17, 1
    %p61 = por %p59, %p60
    %p63 = scmp.ne.s32.totalorder %s48, %s62
    %p64 = scmp.eq.s32.totalorder %s17, 0
    %p65 = por %p63, %p64
    %s66 = ssub.s32 %s11, %s18
    %p67 = scmp.eq.s32.totalorder %s66, 0
    %s69 = sadd.s32 %s68, 1
    %s70 = scalar_select %p67, %s68, %s69
    %p73 = pneg %p67
    %p74 = scmp.eq.s32.totalorder %s11, 1
    %p75 = por %p73, %p74
    %p76 = scmp.ne.s32.totalorder %s68, %s71
    %p77 = scmp.eq.s32.totalorder %s11, 0
    %p78 = por %p76, %p77
    %p79 = scmp.ne.s32.totalorder %s68, %s71
    %p80 = scmp.eq.s32.totalorder %s16, 1
    %p81 = por %p79, %p80
    %p82 = scmp.ne.s32.totalorder %s71, %s72
    %p83 = scmp.eq.s32.totalorder %s16, 0
    %p84 = por %p82, %p83
    %p85 = scmp.ne.s32.totalorder %s71, %s72
    %p86 = scmp.eq.s32.totalorder %s17, 1
    %p87 = por %p85, %p86
    %p89 = scmp.ne.s32.totalorder %s72, %s88
    %p90 = scmp.eq.s32.totalorder %s17, 0
    %p91 = por %p89, %p90
    %s92 = ssub.s32 %s11, %s18
    %p93 = scmp.eq.s32.totalorder %s92, 0
    %s95 = sadd.s32 %s94, 1
    %s96 = scalar_select %p93, %s94, %s95
    %p99 = pneg %p93
    %p100 = scmp.eq.s32.totalorder %s11, 1
    %p101 = por %p99, %p100
    %p102 = scmp.ne.s32.totalorder %s94, %s97
    %p103 = scmp.eq.s32.totalorder %s11, 0
    %p104 = por %p102, %p103
    %p105 = scmp.ne.s32.totalorder %s94, %s97
    %p106 = scmp.eq.s32.totalorder %s16, 1
    %p107 = por %p105, %p106
    %p108 = scmp.ne.s32.totalorder %s97, %s98
    %p109 = scmp.eq.s32.totalorder %s16, 0
    %p110 = por %p108, %p109
    %p111 = scmp.ne.s32.totalorder %s97, %s98
    %p112 = scmp.eq.s32.totalorder %s17, 1
    %p113 = por %p111, %p112
    %p115 = scmp.ne.s32.totalorder %s98, %s114
    %p116 = scmp.eq.s32.totalorder %s17, 0
    %p117 = por %p115, %p116
    %s118 = ssub.s32 %s11, %s18
    %p119 = scmp.eq.s32.totalorder %s118, 0
    %s121 = sadd.s32 %s120, 1
    %s122 = scalar_select %p119, %s120, %s121
    %p125 = pneg %p119
    %p126 = scmp.eq.s32.totalorder %s11, 1
    %p127 = por %p125, %p126
    %p128 = scmp.ne.s32.totalorder %s120, %s123
    %p129 = scmp.eq.s32.totalorder %s11, 0
    %p130 = por %p128, %p129
    %p131 = scmp.ne.s32.totalorder %s120, %s123
    %p132 = scmp.eq.s32.totalorder %s16, 1
    %p133 = por %p131, %p132
    %p134 = scmp.ne.s32.totalorder %s123, %s124
    %p135 = scmp.eq.s32.totalorder %s16, 0
    %p136 = por %p134, %p135
    %p137 = scmp.ne.s32.totalorder %s123, %s124
    %p138 = scmp.eq.s32.totalorder %s17, 1
    %p139 = por %p137, %p138
    %p141 = scmp.ne.s32.totalorder %s124, %s140
    %p142 = scmp.eq.s32.totalorder %s17, 0
    %p143 = por %p141, %p142
    %p144 = scmp.le.s32.totalorder 1, %s11
    %p145 = scmp.lt.s32.totalorder %s11, 3
    %p146 = pnand %p144, %p145
    %p147 = pneg %p146
    // Predicated region
    $region9: #{bottleneck_forward.7} parent=5 // pred_check
      _
    $region10: #{bottleneck_forward.7} parent=5 // pred_check_branch
      %149 = sbr.rel (%p146) target = $region12
    $region11: #{bottleneck_forward.7} parent=5 // pred_region
      %s150 = ssub.s32 %s11, 1
      // Predicated region
      $region13: #{bottleneck_forward.7} parent=11 // pred_check
        %p151 = pneg %p58
      $region14: #{bottleneck_forward.7} parent=11 // pred_check_branch
        %153 = sbr.rel (%p151) target = $region16
      $region15: #{bottleneck_forward.7} parent=11 // pred_region
        _
      $region16: #{bottleneck_forward.7} parent=11 // pred_fallthru
        _
    $region12: #{bottleneck_forward.7} parent=5 // pred_fallthru
      _
    %p154 = scmp.lt.s32.totalorder %s11, 2
    // Predicated region
    $region17: #{bottleneck_forward.7} parent=5 // pred_check
      %p155 = pneg %p154
    $region18: #{bottleneck_forward.7} parent=5 // pred_check_branch
      %157 = sbr.rel (%p155) target = $region20
    $region19: #{bottleneck_forward.7} parent=5 // pred_region
      // Predicated region
      $region21: #{bottleneck_forward.7} parent=19 // pred_check
        %p158 = pneg %p31
      $region22: #{bottleneck_forward.7} parent=19 // pred_check_branch
        %160 = sbr.rel (%p158) target = $region24
      $region23: #{bottleneck_forward.7} parent=19 // pred_region
        %s161 = smul.u32 32, %s11
        %p162 = scmp.lt.s32.totalorder %s161, 63
        %s163 = scalar_select %p162, %s161, 63
        %s164 = smul.addr %s163, 4
        %s165 = scalar_lea.vmem %s0, %s164
        %s166 = smul.u32 32, %s11
      $region24: #{bottleneck_forward.7} parent=19 // pred_fallthru
        _
    $region20: #{bottleneck_forward.7} parent=5 // pred_fallthru
      _
    %p167 = scmp.le.s32.totalorder 1, %s11
    %p168 = scmp.lt.s32.totalorder %s11, 3
    %p169 = pnand %p167, %p168
    %p170 = pneg %p169
    // Predicated region
    $region25: #{bottleneck_forward.7} parent=5 // pred_check
      _
    $region26: #{bottleneck_forward.7} parent=5 // pred_check_branch
      %172 = sbr.rel (%p169) target = $region28
    $region27: #{bottleneck_forward.7} parent=5 // pred_region
      %s173 = ssub.s32 %s11, 1
      %s174 = smul.u32 32, %s16
      %p175 = scmp.lt.s32.totalorder %s174, 63
      %s176 = scalar_select %p175, %s174, 63
      %s177 = smul.addr %s176, 4
      %s178 = scalar_lea.vmem %s0, %s177
      %p179 = pneg %p37
      %p180 = pneg %p34
      %p181 = pneg %p58
      %p182 = pneg %p55
      %p183 = pneg %p84
      %p184 = pneg %p81
      %s185 = smul.u32 32, %s16
      %p186 = scmp.lt.s32.totalorder %s185, 63
      %s187 = scalar_select %p186, %s185, 63
      %s188 = smul.addr %s187, 8
      %s189 = scalar_lea.vmem %s2, %s188
      %p190 = pneg %p110
      %p191 = pneg %p107
      %p192 = scmp.lt.s32.totalorder %s16, 1
      %s193 = scalar_select %p192, %s16, 1
      %s194 = scalar_lea.vmem %s3, %s193
      %p195 = pneg %p136
      %p196 = pneg %p133
      %p197 = scmp.lt.s32.totalorder %s16, 1
      %s198 = scalar_select %p197, %s16, 1
      %s199 = scalar_lea.vmem %s4, %s198
      %s200 = smul.u32 32, %s16
      %p201 = scmp.lt.s32.totalorder %s200, 63
      %s202 = scalar_select %p201, %s200, 63
      %s203 = smul.addr %s202, 4
      %s204 = scalar_lea.vmem %s0, %s203
      %s205 = smul.u32 32, %s16
      %s206 = smul.u32 32, %s16
      %p207 = scmp.lt.s32.totalorder %s206, 63
      %s208 = scalar_select %p207, %s206, 63
      %s209 = smul.addr %s208, 8
      %s210 = scalar_lea.vmem %s2, %s209
      %s211 = smul.u32 32, %s16
      %p212 = scmp.lt.s32.totalorder %s16, 1
      %s213 = scalar_select %p212, %s16, 1
      %s214 = scalar_lea.vmem %s3, %s213
      %p215 = scmp.lt.s32.totalorder %s16, 1
      %s216 = scalar_select %p215, %s16, 1
      %s217 = scalar_lea.vmem %s4, %s216
      %v218 = vld [vmem:[%s204] sm:$0xf]
      %v219 = vld [vmem:[%s204 + $0x4] sm:$0xf]
      %v220 = vld [vmem:[%s204 + $0x8] sm:$0xf]
      %v221 = vld [vmem:[%s204 + $0xc] sm:$0xf]
      %v222 = vld [vmem:[%s204 + $0x10] sm:$0xf]
      %v223 = vld [vmem:[%s204 + $0x14] sm:$0xf]
      %v224 = vld [vmem:[%s204 + $0x18] sm:$0xf]
      %v225 = vld [vmem:[%s204 + $0x1c] sm:$0xf]
      %v226 = vld [vmem:[%s204 + $0x20] sm:$0xf]
      %v227 = vld [vmem:[%s204 + $0x24] sm:$0xf]
      %v228 = vld [vmem:[%s204 + $0x28] sm:$0xf]
      %v229 = vld [vmem:[%s204 + $0x2c] sm:$0xf]
      %v230 = vld [vmem:[%s204 + $0x30] sm:$0xf]
      %v231 = vld [vmem:[%s204 + $0x34] sm:$0xf]
      %v232 = vld [vmem:[%s204 + $0x38] sm:$0xf]
      %v233 = vld [vmem:[%s204 + $0x3c] sm:$0xf]
      %v234 = vld [vmem:[%s204 + $0x40] sm:$0xf]
      %v235 = vld [vmem:[%s204 + $0x44] sm:$0xf]
      %v236 = vld [vmem:[%s204 + $0x48] sm:$0xf]
      %v237 = vld [vmem:[%s204 + $0x4c] sm:$0xf]
      %v238 = vld [vmem:[%s204 + $0x50] sm:$0xf]
      %v239 = vld [vmem:[%s204 + $0x54] sm:$0xf]
      %v240 = vld [vmem:[%s204 + $0x58] sm:$0xf]
      %v241 = vld [vmem:[%s204 + $0x5c] sm:$0xf]
      %v242 = vld [vmem:[%s204 + $0x60] sm:$0xf]
      %v243 = vld [vmem:[%s204 + $0x64] sm:$0xf]
      %v244 = vld [vmem:[%s204 + $0x68] sm:$0xf]
      %v245 = vld [vmem:[%s204 + $0x6c] sm:$0xf]
      %v246 = vld [vmem:[%s204 + $0x70] sm:$0xf]
      %v247 = vld [vmem:[%s204 + $0x74] sm:$0xf]
      %v248 = vld [vmem:[%s204 + $0x78] sm:$0xf]
      %v249 = vld [vmem:[%s204 + $0x7c] sm:$0xf]
      %v250 = vld [vmem:[%s1] sm:$0xf]
      %v251 = vld [vmem:[%s1 + $0x4] sm:$0xf]
      %v252 = vld [vmem:[%s1 + $0x8] sm:$0xf]
      %v253 = vld [vmem:[%s1 + $0xc] sm:$0xf]
      %v254 = vld [vmem:[%s1 + $0x10] sm:$0xf]
      %v255 = vld [vmem:[%s1 + $0x14] sm:$0xf]
      %v256 = vld [vmem:[%s1 + $0x18] sm:$0xf]
      %v257 = vld [vmem:[%s1 + $0x1c] sm:$0xf]
      %v258 = vld [vmem:[%s1 + $0x20] sm:$0xf]
      %v259 = vld [vmem:[%s1 + $0x24] sm:$0xf]
      %v260 = vld [vmem:[%s1 + $0x28] sm:$0xf]
      %v261 = vld [vmem:[%s1 + $0x2c] sm:$0xf]
      %v262 = vld [vmem:[%s1 + $0x30] sm:$0xf]
      %v263 = vld [vmem:[%s1 + $0x34] sm:$0xf]
      %v264 = vld [vmem:[%s1 + $0x38] sm:$0xf]
      %v265 = vld [vmem:[%s1 + $0x3c] sm:$0xf]
      %v298 = vunpack.c.l.b16 %v218
      %v299 = vunpack.c.l.b16 %v219
      %v300 = vunpack.c.l.b16 %v220
      %v301 = vunpack.c.l.b16 %v221
      %v302 = vunpack.c.l.b16 %v222
      %v303 = vunpack.c.l.b16 %v223
      %v304 = vunpack.c.l.b16 %v224
      %v305 = vunpack.c.l.b16 %v225
      %v306 = vunpack.c.l.b16 %v226
      %v307 = vunpack.c.l.b16 %v227
      %v308 = vunpack.c.l.b16 %v228
      %v309 = vunpack.c.l.b16 %v229
      %v310 = vunpack.c.l.b16 %v230
      %v311 = vunpack.c.l.b16 %v231
      %v312 = vunpack.c.l.b16 %v232
      %v313 = vunpack.c.l.b16 %v233
      %v314 = vunpack.c.l.b16 %v234
      %v315 = vunpack.c.l.b16 %v235
      %v316 = vunpack.c.l.b16 %v236
      %v317 = vunpack.c.l.b16 %v237
      %v318 = vunpack.c.l.b16 %v238
      %v319 = vunpack.c.l.b16 %v239
      %v320 = vunpack.c.l.b16 %v240
      %v321 = vunpack.c.l.b16 %v241
      %v322 = vunpack.c.l.b16 %v242
      %v323 = vunpack.c.l.b16 %v243
      %v324 = vunpack.c.l.b16 %v244
      %v325 = vunpack.c.l.b16 %v245
      %v326 = vunpack.c.l.b16 %v246
      %v327 = vunpack.c.l.b16 %v247
      %v328 = vunpack.c.l.b16 %v248
      %v329 = vunpack.c.l.b16 %v249
      %v330 = vpack.c.b16 %v299, %v298
      %v331 = vpack.c.b16 %v301, %v300
      %v332 = vpack.c.b16 %v303, %v302
      %v333 = vpack.c.b16 %v305, %v304
      %v334 = vpack.c.b16 %v307, %v306
      %v335 = vpack.c.b16 %v309, %v308
      %v336 = vpack.c.b16 %v311, %v310
      %v337 = vpack.c.b16 %v313, %v312
      %v338 = vpack.c.b16 %v315, %v314
      %v339 = vpack.c.b16 %v317, %v316
      %v340 = vpack.c.b16 %v319, %v318
      %v341 = vpack.c.b16 %v321, %v320
      %v342 = vpack.c.b16 %v323, %v322
      %v343 = vpack.c.b16 %v325, %v324
      %v344 = vpack.c.b16 %v327, %v326
      %v345 = vpack.c.b16 %v329, %v328
      %v378 = vunpack.c.l.b16 %v250
      %v379 = vunpack.c.l.b16 %v251
      %v380 = vunpack.c.l.b16 %v252
      %v381 = vunpack.c.l.b16 %v253
      %v382 = vunpack.c.l.b16 %v254
      %v383 = vunpack.c.l.b16 %v255
      %v384 = vunpack.c.l.b16 %v256
      %v385 = vunpack.c.l.b16 %v257
      %v386 = vunpack.c.l.b16 %v258
      %v387 = vunpack.c.l.b16 %v259
      %v388 = vunpack.c.l.b16 %v260
      %v389 = vunpack.c.l.b16 %v261
      %v390 = vunpack.c.l.b16 %v262
      %v391 = vunpack.c.l.b16 %v263
      %v392 = vunpack.c.l.b16 %v264
      %v393 = vunpack.c.l.b16 %v265
      %v394 = vpack.c.b16 %v379, %v378
      %v395 = vpack.c.b16 %v381, %v380
      %v396 = vpack.c.b16 %v383, %v382
      %v397 = vpack.c.b16 %v385, %v384
      %v398 = vpack.c.b16 %v387, %v386
      %v399 = vpack.c.b16 %v389, %v388
      %v400 = vpack.c.b16 %v391, %v390
      %v401 = vpack.c.b16 %v393, %v392
      %410 = vmatpush.bf16.msra.mxu0 %v401
      %411 = vmatpush.bf16.msra.mxu0 %v400
      %412 = vmatpush.bf16.msra.mxu0 %v399
      %413 = vmatpush.bf16.msra.mxu0 %v398
      %414 = vmatpush.bf16.msra.mxu0 %v397
      %415 = vmatpush.bf16.msra.mxu0 %v396
      %416 = vmatpush.bf16.msra.mxu0 %v395
      %417 = vmatpush.bf16.msra.mxu0 %v394
      %418 = vmatmul.bf16.gmra.mxu0 %v330
      %v419 = vpop.f32.mrf.mxu0
      %v420 = vadd.f32 0.0, %v419
      %v421 = vpop.f32.mrf.mxu0
      %v422 = vadd.f32 0.0, %v421
      %423 = vmatmul.bf16.gmra.mxu0 %v331
      %v424 = vpop.f32.mrf.mxu0
      %v425 = vadd.f32 0.0, %v424
      %v426 = vpop.f32.mrf.mxu0
      %v427 = vadd.f32 0.0, %v426
      %428 = vmatmul.bf16.gmra.mxu0 %v332
      %v429 = vpop.f32.mrf.mxu0
      %v430 = vadd.f32 0.0, %v429
      %v431 = vpop.f32.mrf.mxu0
      %v432 = vadd.f32 0.0, %v431
      %433 = vmatmul.bf16.gmra.mxu0 %v333
      %v434 = vpop.f32.mrf.mxu0
      %v435 = vadd.f32 0.0, %v434
      %v436 = vpop.f32.mrf.mxu0
      %v437 = vadd.f32 0.0, %v436
      %438 = vmatmul.bf16.gmra.mxu0 %v334
      %v439 = vpop.f32.mrf.mxu0
      %v440 = vadd.f32 0.0, %v439
      %v441 = vpop.f32.mrf.mxu0
      %v442 = vadd.f32 0.0, %v441
      %443 = vmatmul.bf16.gmra.mxu0 %v335
      %v444 = vpop.f32.mrf.mxu0
      %v445 = vadd.f32 0.0, %v444
      %v446 = vpop.f32.mrf.mxu0
      %v447 = vadd.f32 0.0, %v446
      %448 = vmatmul.bf16.gmra.mxu0 %v336
      %v449 = vpop.f32.mrf.mxu0
      %v450 = vadd.f32 0.0, %v449
      %v451 = vpop.f32.mrf.mxu0
      %v452 = vadd.f32 0.0, %v451
      %453 = vmatmul.bf16.gmra.mxu0 %v337
      %v454 = vpop.f32.mrf.mxu0
      %v455 = vadd.f32 0.0, %v454
      %v456 = vpop.f32.mrf.mxu0
      %v457 = vadd.f32 0.0, %v456
      %458 = vmatmul.bf16.gmra.mxu0 %v338
      %v459 = vpop.f32.mrf.mxu0
      %v460 = vadd.f32 0.0, %v459
      %v461 = vpop.f32.mrf.mxu0
      %v462 = vadd.f32 0.0, %v461
      %463 = vmatmul.bf16.gmra.mxu0 %v339
      %v464 = vpop.f32.mrf.mxu0
      %v465 = vadd.f32 0.0, %v464
      %v466 = vpop.f32.mrf.mxu0
      %v467 = vadd.f32 0.0, %v466
      %468 = vmatmul.bf16.gmra.mxu0 %v340
      %v469 = vpop.f32.mrf.mxu0
      %v470 = vadd.f32 0.0, %v469
      %v471 = vpop.f32.mrf.mxu0
      %v472 = vadd.f32 0.0, %v471
      %473 = vmatmul.bf16.gmra.mxu0 %v341
      %v474 = vpop.f32.mrf.mxu0
      %v475 = vadd.f32 0.0, %v474
      %v476 = vpop.f32.mrf.mxu0
      %v477 = vadd.f32 0.0, %v476
      %478 = vmatmul.bf16.gmra.mxu0 %v342
      %v479 = vpop.f32.mrf.mxu0
      %v480 = vadd.f32 0.0, %v479
      %v481 = vpop.f32.mrf.mxu0
      %v482 = vadd.f32 0.0, %v481
      %483 = vmatmul.bf16.gmra.mxu0 %v343
      %v484 = vpop.f32.mrf.mxu0
      %v485 = vadd.f32 0.0, %v484
      %v486 = vpop.f32.mrf.mxu0
      %v487 = vadd.f32 0.0, %v486
      %488 = vmatmul.bf16.gmra.mxu0 %v344
      %v489 = vpop.f32.mrf.mxu0
      %v490 = vadd.f32 0.0, %v489
      %v491 = vpop.f32.mrf.mxu0
      %v492 = vadd.f32 0.0, %v491
      %493 = vmatmul.bf16.gmra.mxu0 %v345
      %v494 = vpop.f32.mrf.mxu0
      %v495 = vadd.f32 0.0, %v494
      %v496 = vpop.f32.mrf.mxu0
      %v497 = vadd.f32 0.0, %v496
      %498 = vdwg.mxu0
      %499 = vst [vmem:[%s210] sm:$0xff] %v420
      %500 = vst [vmem:[%s210 + $0x8] sm:$0xff] %v422
      %501 = vst [vmem:[%s210 + $0x10] sm:$0xff] %v425
      %502 = vst [vmem:[%s210 + $0x18] sm:$0xff] %v427
      %503 = vst [vmem:[%s210 + $0x20] sm:$0xff] %v430
      %504 = vst [vmem:[%s210 + $0x28] sm:$0xff] %v432
      %505 = vst [vmem:[%s210 + $0x30] sm:$0xff] %v435
      %506 = vst [vmem:[%s210 + $0x38] sm:$0xff] %v437
      %507 = vst [vmem:[%s210 + $0x40] sm:$0xff] %v440
      %508 = vst [vmem:[%s210 + $0x48] sm:$0xff] %v442
      %509 = vst [vmem:[%s210 + $0x50] sm:$0xff] %v445
      %510 = vst [vmem:[%s210 + $0x58] sm:$0xff] %v447
      %511 = vst [vmem:[%s210 + $0x60] sm:$0xff] %v450
      %512 = vst [vmem:[%s210 + $0x68] sm:$0xff] %v452
      %513 = vst [vmem:[%s210 + $0x70] sm:$0xff] %v455
      %514 = vst [vmem:[%s210 + $0x78] sm:$0xff] %v457
      %515 = vst [vmem:[%s210 + $0x80] sm:$0xff] %v460
      %516 = vst [vmem:[%s210 + $0x88] sm:$0xff] %v462
      %517 = vst [vmem:[%s210 + $0x90] sm:$0xff] %v465
      %518 = vst [vmem:[%s210 + $0x98] sm:$0xff] %v467
      %519 = vst [vmem:[%s210 + $0xa0] sm:$0xff] %v470
      %520 = vst [vmem:[%s210 + $0xa8] sm:$0xff] %v472
      %521 = vst [vmem:[%s210 + $0xb0] sm:$0xff] %v475
      %522 = vst [vmem:[%s210 + $0xb8] sm:$0xff] %v477
      %523 = vst [vmem:[%s210 + $0xc0] sm:$0xff] %v480
      %524 = vst [vmem:[%s210 + $0xc8] sm:$0xff] %v482
      %525 = vst [vmem:[%s210 + $0xd0] sm:$0xff] %v485
      %526 = vst [vmem:[%s210 + $0xd8] sm:$0xff] %v487
      %527 = vst [vmem:[%s210 + $0xe0] sm:$0xff] %v490
      %528 = vst [vmem:[%s210 + $0xe8] sm:$0xff] %v492
      %529 = vst [vmem:[%s210 + $0xf0] sm:$0xff] %v495
      %530 = vst [vmem:[%s210 + $0xf8] sm:$0xff] %v497
      %v531 = vadd.f32 %v420, %v422
      %v532 = vadd.f32 %v531, %v425
      %v533 = vadd.f32 %v532, %v427
      %v534 = vadd.f32 %v533, %v430
      %v535 = vadd.f32 %v534, %v432
      %v536 = vadd.f32 %v535, %v435
      %v537 = vadd.f32 %v536, %v437
      %v538 = vadd.f32 %v537, %v440
      %v539 = vadd.f32 %v538, %v442
      %v540 = vadd.f32 %v539, %v445
      %v541 = vadd.f32 %v540, %v447
      %v542 = vadd.f32 %v541, %v450
      %v543 = vadd.f32 %v542, %v452
      %v544 = vadd.f32 %v543, %v455
      %v545 = vadd.f32 %v544, %v457
      %v546 = vadd.f32 %v545, %v460
      %v547 = vadd.f32 %v546, %v462
      %v548 = vadd.f32 %v547, %v465
      %v549 = vadd.f32 %v548, %v467
      %v550 = vadd.f32 %v549, %v470
      %v551 = vadd.f32 %v550, %v472
      %v552 = vadd.f32 %v551, %v475
      %v553 = vadd.f32 %v552, %v477
      %v554 = vadd.f32 %v553, %v480
      %v555 = vadd.f32 %v554, %v482
      %v556 = vadd.f32 %v555, %v485
      %v557 = vadd.f32 %v556, %v487
      %v558 = vadd.f32 %v557, %v490
      %v559 = vadd.f32 %v558, %v492
      %v560 = vadd.f32 %v559, %v495
      %v561 = vadd.f32 %v560, %v497
      %v562 = vrot.slane %v561, 4
      %v563 = vadd.f32 %v561, %v562
      %v564 = vrot.slane %v563, 2
      %v565 = vadd.f32 %v563, %v564
      %v566 = vrot.slane %v565, 1
      %v567 = vadd.f32 %v565, %v566
      %568 = vst [vmem:[%s214] sm:$0x1] %v567
      %v569 = vmul.f32 %v420, %v420
      %v570 = vmul.f32 %v422, %v422
      %v571 = vmul.f32 %v425, %v425
      %v572 = vmul.f32 %v427, %v427
      %v573 = vmul.f32 %v430, %v430
      %v574 = vmul.f32 %v432, %v432
      %v575 = vmul.f32 %v435, %v435
      %v576 = vmul.f32 %v437, %v437
      %v577 = vmul.f32 %v440, %v440
      %v578 = vmul.f32 %v442, %v442
      %v579 = vmul.f32 %v445, %v445
      %v580 = vmul.f32 %v447, %v447
      %v581 = vmul.f32 %v450, %v450
      %v582 = vmul.f32 %v452, %v452
      %v583 = vmul.f32 %v455, %v455
      %v584 = vmul.f32 %v457, %v457
      %v585 = vmul.f32 %v460, %v460
      %v586 = vmul.f32 %v462, %v462
      %v587 = vmul.f32 %v465, %v465
      %v588 = vmul.f32 %v467, %v467
      %v589 = vmul.f32 %v470, %v470
      %v590 = vmul.f32 %v472, %v472
      %v591 = vmul.f32 %v475, %v475
      %v592 = vmul.f32 %v477, %v477
      %v593 = vmul.f32 %v480, %v480
      %v594 = vmul.f32 %v482, %v482
      %v595 = vmul.f32 %v485, %v485
      %v596 = vmul.f32 %v487, %v487
      %v597 = vmul.f32 %v490, %v490
      %v598 = vmul.f32 %v492, %v492
      %v599 = vmul.f32 %v495, %v495
      %v600 = vmul.f32 %v497, %v497
      %v601 = vadd.f32 %v569, %v570
      %v602 = vadd.f32 %v601, %v571
      %v603 = vadd.f32 %v602, %v572
      %v604 = vadd.f32 %v603, %v573
      %v605 = vadd.f32 %v604, %v574
      %v606 = vadd.f32 %v605, %v575
      %v607 = vadd.f32 %v606, %v576
      %v608 = vadd.f32 %v607, %v577
      %v609 = vadd.f32 %v608, %v578
      %v610 = vadd.f32 %v609, %v579
      %v611 = vadd.f32 %v610, %v580
      %v612 = vadd.f32 %v611, %v581
      %v613 = vadd.f32 %v612, %v582
      %v614 = vadd.f32 %v613, %v583
      %v615 = vadd.f32 %v614, %v584
      %v616 = vadd.f32 %v615, %v585
      %v617 = vadd.f32 %v616, %v586
      %v618 = vadd.f32 %v617, %v587
      %v619 = vadd.f32 %v618, %v588
      %v620 = vadd.f32 %v619, %v589
      %v621 = vadd.f32 %v620, %v590
      %v622 = vadd.f32 %v621, %v591
      %v623 = vadd.f32 %v622, %v592
      %v624 = vadd.f32 %v623, %v593
      %v625 = vadd.f32 %v624, %v594
      %v626 = vadd.f32 %v625, %v595
      %v627 = vadd.f32 %v626, %v596
      %v628 = vadd.f32 %v627, %v597
      %v629 = vadd.f32 %v628, %v598
      %v630 = vadd.f32 %v629, %v599
      %v631 = vadd.f32 %v630, %v600
      %v632 = vrot.slane %v631, 4
      %v633 = vadd.f32 %v631, %v632
      %v634 = vrot.slane %v633, 2
      %v635 = vadd.f32 %v633, %v634
      %v636 = vrot.slane %v635, 1
      %v637 = vadd.f32 %v635, %v636
      %638 = vst [vmem:[%s217] sm:$0x1] %v637
      %s639 = smul.u32 32, %s16
      %p640 = scmp.lt.s32.totalorder %s639, 63
      %s641 = scalar_select %p640, %s639, 63
      %s642 = smul.addr %s641, 8
      %s643 = scalar_lea.vmem %s2, %s642
      %p644 = scmp.lt.s32.totalorder %s16, 1
      %s645 = scalar_select %p644, %s16, 1
      %s646 = scalar_lea.vmem %s3, %s645
      %p647 = scmp.lt.s32.totalorder %s16, 1
      %s648 = scalar_select %p647, %s16, 1
      %s649 = scalar_lea.vmem %s4, %s648
      // Predicated region
      $region29: #{bottleneck_forward.7} parent=27 // pred_check
        %p650 = pneg %p81
      $region30: #{bottleneck_forward.7} parent=27 // pred_check_branch
        %652 = sbr.rel (%p650) target = $region32
      $region31: #{bottleneck_forward.7} parent=27 // pred_region
        %s653 = smul.u32 32, %s16
      $region32: #{bottleneck_forward.7} parent=27 // pred_fallthru
        _
      // Predicated region
      $region33: #{bottleneck_forward.7} parent=27 // pred_check
        %p654 = pneg %p107
      $region34: #{bottleneck_forward.7} parent=27 // pred_check_branch
        %656 = sbr.rel (%p654) target = $region36
      $region35: #{bottleneck_forward.7} parent=27 // pred_region
        _
      $region36: #{bottleneck_forward.7} parent=27 // pred_fallthru
        _
      // Predicated region
      $region37: #{bottleneck_forward.7} parent=27 // pred_check
        %p657 = pneg %p133
      $region38: #{bottleneck_forward.7} parent=27 // pred_check_branch
        %659 = sbr.rel (%p657) target = $region40
      $region39: #{bottleneck_forward.7} parent=27 // pred_region
        _
      $region40: #{bottleneck_forward.7} parent=27 // pred_fallthru
        _
    $region28: #{bottleneck_forward.7} parent=5 // pred_fallthru
      _
    %p660 = scmp.le.s32.totalorder 2, %s11
    // Predicated region
    $region41: #{bottleneck_forward.7} parent=5 // pred_check
      %p661 = pneg %p660
    $region42: #{bottleneck_forward.7} parent=5 // pred_check_branch
      %663 = sbr.rel (%p661) target = $region44
    $region43: #{bottleneck_forward.7} parent=5 // pred_region
      %s664 = ssub.s32 %s11, 2
      // Predicated region
      $region45: #{bottleneck_forward.7} parent=43 // pred_check
        %p665 = pneg %p87
      $region46: #{bottleneck_forward.7} parent=43 // pred_check_branch
        %667 = sbr.rel (%p665) target = $region48
      $region47: #{bottleneck_forward.7} parent=43 // pred_region
        %s668 = smul.u32 32, %s17
        %p669 = scmp.lt.s32.totalorder %s668, 63
        %s670 = scalar_select %p669, %s668, 63
        %s671 = smul.addr %s670, 8
        %s672 = scalar_lea.vmem %s2, %s671
      $region48: #{bottleneck_forward.7} parent=43 // pred_fallthru
        _
      // Predicated region
      $region49: #{bottleneck_forward.7} parent=43 // pred_check
        %p673 = pneg %p113
      $region50: #{bottleneck_forward.7} parent=43 // pred_check_branch
        %675 = sbr.rel (%p673) target = $region52
      $region51: #{bottleneck_forward.7} parent=43 // pred_region
        %p676 = scmp.lt.s32.totalorder %s17, 1
        %s677 = scalar_select %p676, %s17, 1
        %s678 = scalar_lea.vmem %s3, %s677
      $region52: #{bottleneck_forward.7} parent=43 // pred_fallthru
        _
      // Predicated region
      $region53: #{bottleneck_forward.7} parent=43 // pred_check
        %p679 = pneg %p139
      $region54: #{bottleneck_forward.7} parent=43 // pred_check_branch
        %681 = sbr.rel (%p679) target = $region56
      $region55: #{bottleneck_forward.7} parent=43 // pred_region
        %p682 = scmp.lt.s32.totalorder %s17, 1
        %s683 = scalar_select %p682, %s17, 1
        %s684 = scalar_lea.vmem %s4, %s683
      $region56: #{bottleneck_forward.7} parent=43 // pred_fallthru
        _
    $region44: #{bottleneck_forward.7} parent=5 // pred_fallthru
      _
  $region6: #{bottleneck_forward.7} parent=0 // loop_footer
    %s15 = sadd.s32 1, %s11
  $region7: #{bottleneck_forward.7} parent=0 // loop_footer_branch
    %10 = sbr.rel target = $region3
  $region8: #{bottleneck_forward.7} parent=0 // loop_exit
    _

// kernel: bottleneck_forward.10
$region0: #{bottleneck_forward.10}
  #allocation0 [shape = 'u32[]', space=smem, size = 0x4, offset = 0x4, fixed_abs, tag = 'smem constant byte address 0x4 - core index']
  #allocation1 [shape = 'u32[72,128]{1,0:T(1,128)}', space=vmem, size = 0x9000, scoped, tag = 'internal scratch']
  %s0 = inlined_call_operand.vmem [shape: f32[128,128], index: 0, kind: input, shape index: {}]
  %s1 = inlined_call_operand.vmem [shape: f32[1,128], index: 1, kind: input, shape index: {}]
  %s2 = inlined_call_operand.vmem [shape: f32[1,128], index: 2, kind: input, shape index: {}]
  %s3 = inlined_call_operand.vmem [shape: bf16[128,128], index: 3, kind: output, shape index: {}]
  %s4 = sld [smem:[#allocation0]]
  $region22: #{bottleneck_forward.10} parent=0
    _
  %s6 = ssub.s32 1, %s4
  %s7 = scalar_select 0, %s6, %s4
  // Predicated region
  $region2: #{bottleneck_forward.10} parent=0 // pred_check
    _
  $region3: #{bottleneck_forward.10} parent=0 // pred_check_branch
    %9 = sbr.rel (0) target = $region5
  $region4: #{bottleneck_forward.10} parent=0 // pred_region
    _
  $region5: #{bottleneck_forward.10} parent=0 // pred_fallthru
    _
  // Predicated region
  $region6: #{bottleneck_forward.10} parent=0 // pred_check
    _
  $region7: #{bottleneck_forward.10} parent=0 // pred_check_branch
    %11 = sbr.rel (0) target = $region9
  $region8: #{bottleneck_forward.10} parent=0 // pred_region
    _
  $region9: #{bottleneck_forward.10} parent=0 // pred_fallthru
    _
  // Predicated region
  $region10: #{bottleneck_forward.10} parent=0 // pred_check
    _
  $region11: #{bottleneck_forward.10} parent=0 // pred_check_branch
    %13 = sbr.rel (0) target = $region13
  $region12: #{bottleneck_forward.10} parent=0 // pred_region
    _
  $region13: #{bottleneck_forward.10} parent=0 // pred_fallthru
    _
  %v14 = vld [vmem:[%s0] sm:$0xff]
  %v15 = vld [vmem:[%s0 + $0x8] sm:$0xff]
  %v16 = vld [vmem:[%s0 + $0x10] sm:$0xff]
  %v17 = vld [vmem:[%s0 + $0x18] sm:$0xff]
  %v18 = vld [vmem:[%s0 + $0x20] sm:$0xff]
  %v19 = vld [vmem:[%s0 + $0x28] sm:$0xff]
  %v20 = vld [vmem:[%s0 + $0x30] sm:$0xff]
  %v21 = vld [vmem:[%s0 + $0x38] sm:$0xff]
  %v22 = vld [vmem:[%s0 + $0x40] sm:$0xff]
  %v23 = vld [vmem:[%s0 + $0x48] sm:$0xff]
  %v24 = vld [vmem:[%s0 + $0x50] sm:$0xff]
  %v25 = vld [vmem:[%s0 + $0x58] sm:$0xff]
  %v26 = vld [vmem:[%s0 + $0x60] sm:$0xff]
  %v27 = vld [vmem:[%s0 + $0x68] sm:$0xff]
  %v28 = vld [vmem:[%s0 + $0x70] sm:$0xff]
  %v29 = vld [vmem:[%s0 + $0x78] sm:$0xff]
  %v30 = vld [vmem:[%s1] sm:$0x1]
  %v32 = vperm.slane %v30, 0
  %v34 = vmul.f32 %v14, %v32
  %v35 = vmul.f32 %v15, %v32
  %v36 = vmul.f32 %v16, %v32
  %v37 = vmul.f32 %v17, %v32
  %v38 = vmul.f32 %v18, %v32
  %v39 = vmul.f32 %v19, %v32
  %v40 = vmul.f32 %v20, %v32
  %v41 = vmul.f32 %v21, %v32
  %v42 = vmul.f32 %v22, %v32
  %v43 = vmul.f32 %v23, %v32
  %v44 = vmul.f32 %v24, %v32
  %v45 = vmul.f32 %v25, %v32
  %v46 = vmul.f32 %v26, %v32
  %v47 = vmul.f32 %v27, %v32
  %v48 = vmul.f32 %v28, %v32
  %v49 = vmul.f32 %v29, %v32
  %v50 = vld [vmem:[%s2] sm:$0x1]
  %v52 = vperm.slane %v50, 0
  %v54 = vadd.f32 %v34, %v52
  %v55 = vadd.f32 %v35, %v52
  %v56 = vadd.f32 %v36, %v52
  %v57 = vadd.f32 %v37, %v52
  %v58 = vadd.f32 %v38, %v52
  %v59 = vadd.f32 %v39, %v52
  %v60 = vadd.f32 %v40, %v52
  %v61 = vadd.f32 %v41, %v52
  %v62 = vadd.f32 %v42, %v52
  %v63 = vadd.f32 %v43, %v52
  %v64 = vadd.f32 %v44, %v52
  %v65 = vadd.f32 %v45, %v52
  %v66 = vadd.f32 %v46, %v52
  %v67 = vadd.f32 %v47, %v52
  %v68 = vadd.f32 %v48, %v52
  %v69 = vadd.f32 %v49, %v52
  %v70 = vmax.f32 %v54, 0.0
  %v71 = vmax.f32 %v55, 0.0
  %v72 = vmax.f32 %v56, 0.0
  %v73 = vmax.f32 %v57, 0.0
  %v74 = vmax.f32 %v58, 0.0
  %v75 = vmax.f32 %v59, 0.0
  %v76 = vmax.f32 %v60, 0.0
  %v77 = vmax.f32 %v61, 0.0
  %v78 = vmax.f32 %v62, 0.0
  %v79 = vmax.f32 %v63, 0.0
  %v80 = vmax.f32 %v64, 0.0
  %v81 = vmax.f32 %v65, 0.0
  %v82 = vmax.f32 %v66, 0.0
  %v83 = vmax.f32 %v67, 0.0
  %v84 = vmax.f32 %v68, 0.0
  %v85 = vmax.f32 %v69, 0.0
  %v86 = vpack.c.bf16 %v70, %v70
  %v87 = vpack.c.bf16 %v71, %v71
  %v88 = vpack.c.bf16 %v72, %v72
  %v89 = vpack.c.bf16 %v73, %v73
  %v90 = vpack.c.bf16 %v74, %v74
  %v91 = vpack.c.bf16 %v75, %v75
  %v92 = vpack.c.bf16 %v76, %v76
  %v93 = vpack.c.bf16 %v77, %v77
  %v94 = vpack.c.bf16 %v78, %v78
  %v95 = vpack.c.bf16 %v79, %v79
  %v96 = vpack.c.bf16 %v80, %v80
  %v97 = vpack.c.bf16 %v81, %v81
  %v98 = vpack.c.bf16 %v82, %v82
  %v99 = vpack.c.bf16 %v83, %v83
  %v100 = vpack.c.bf16 %v84, %v84
  %v101 = vpack.c.bf16 %v85, %v85
  %102 = vst [vmem:[%s3] sm:$0xf] %v86
  %103 = vst [vmem:[%s3 + $0x4] sm:$0xf] %v87
  %104 = vst [vmem:[%s3 + $0x8] sm:$0xf] %v88
  %105 = vst [vmem:[%s3 + $0xc] sm:$0xf] %v89
  %106 = vst [vmem:[%s3 + $0x10] sm:$0xf] %v90
  %107 = vst [vmem:[%s3 + $0x14] sm:$0xf] %v91
  %108 = vst [vmem:[%s3 + $0x18] sm:$0xf] %v92
  %109 = vst [vmem:[%s3 + $0x1c] sm:$0xf] %v93
  %110 = vst [vmem:[%s3 + $0x20] sm:$0xf] %v94
  %111 = vst [vmem:[%s3 + $0x24] sm:$0xf] %v95
  %112 = vst [vmem:[%s3 + $0x28] sm:$0xf] %v96
  %113 = vst [vmem:[%s3 + $0x2c] sm:$0xf] %v97
  %114 = vst [vmem:[%s3 + $0x30] sm:$0xf] %v98
  %115 = vst [vmem:[%s3 + $0x34] sm:$0xf] %v99
  %116 = vst [vmem:[%s3 + $0x38] sm:$0xf] %v100
  %117 = vst [vmem:[%s3 + $0x3c] sm:$0xf] %v101
  // Predicated region
  $region14: #{bottleneck_forward.10} parent=0 // pred_check
    _
  $region15: #{bottleneck_forward.10} parent=0 // pred_check_branch
    %119 = sbr.rel (0) target = $region17
  $region16: #{bottleneck_forward.10} parent=0 // pred_region
    _
  $region17: #{bottleneck_forward.10} parent=0 // pred_fallthru
    _
  // Predicated region
  $region18: #{bottleneck_forward.10} parent=0 // pred_check
    _
  $region19: #{bottleneck_forward.10} parent=0 // pred_check_branch
    %121 = sbr.rel (0) target = $region21
  $region20: #{bottleneck_forward.10} parent=0 // pred_region
    _
  $region21: #{bottleneck_forward.10} parent=0 // pred_fallthru
    _

// kernel: bottleneck_forward.13
$region0: #{bottleneck_forward.13}
  #allocation0 [shape = 'u32[]', space=smem, size = 0x4, offset = 0x4, fixed_abs, tag = 'smem constant byte address 0x4 - core index']
  #allocation1 [shape = 'u32[72,128]{1,0:T(1,128)}', space=vmem, size = 0x9000, scoped, tag = 'internal scratch']
  %s0 = inlined_call_operand.vmem [shape: f32[128,128], index: 0, kind: input, shape index: {}]
  %s1 = inlined_call_operand.vmem [shape: f32[1,128], index: 1, kind: input, shape index: {}]
  %s2 = inlined_call_operand.vmem [shape: f32[1,128], index: 2, kind: input, shape index: {}]
  %s3 = inlined_call_operand.vmem [shape: f32[128,128], index: 3, kind: input, shape index: {}]
  %s4 = inlined_call_operand.vmem [shape: f32[1,128], index: 4, kind: input, shape index: {}]
  %s5 = inlined_call_operand.vmem [shape: f32[1,128], index: 5, kind: input, shape index: {}]
  %s6 = inlined_call_operand.hbm [shape: f32[128,128], index: 6, kind: output, shape index: {}]
  %s7 = sld [smem:[#allocation0]]
  $region34: #{bottleneck_forward.13} parent=0
    _
  %s9 = ssub.s32 1, %s7
  %s10 = scalar_select 0, %s9, %s7
  $region1: #{bottleneck_forward.13} parent=0
    #allocation2 [shape = 'u8[65536]{0}', space=vmem, size = 0x10000, scoped, tag = 'output window, operand 0, single buffered']
    #allocation3 [shape = 's32[1]{0}', space=sflag, size = 0x4, scoped, tag = 'scoped memory for bottleneck_forward.13']
    %11 = vsyncpa [#allocation3], 0
    // Predicated region
    $region2: #{bottleneck_forward.13} parent=1 // pred_check
      _
    $region3: #{bottleneck_forward.13} parent=1 // pred_check_branch
      %13 = sbr.rel (0) target = $region5
    $region4: #{bottleneck_forward.13} parent=1 // pred_region
      _
    $region5: #{bottleneck_forward.13} parent=1 // pred_fallthru
      _
    // Predicated region
    $region6: #{bottleneck_forward.13} parent=1 // pred_check
      _
    $region7: #{bottleneck_forward.13} parent=1 // pred_check_branch
      %15 = sbr.rel (0) target = $region9
    $region8: #{bottleneck_forward.13} parent=1 // pred_region
      _
    $region9: #{bottleneck_forward.13} parent=1 // pred_fallthru
      _
    // Predicated region
    $region10: #{bottleneck_forward.13} parent=1 // pred_check
      _
    $region11: #{bottleneck_forward.13} parent=1 // pred_check_branch
      %17 = sbr.rel (0) target = $region13
    $region12: #{bottleneck_forward.13} parent=1 // pred_region
      _
    $region13: #{bottleneck_forward.13} parent=1 // pred_fallthru
      _
    // Predicated region
    $region14: #{bottleneck_forward.13} parent=1 // pred_check
      _
    $region15: #{bottleneck_forward.13} parent=1 // pred_check_branch
      %19 = sbr.rel (0) target = $region17
    $region16: #{bottleneck_forward.13} parent=1 // pred_region
      _
    $region17: #{bottleneck_forward.13} parent=1 // pred_fallthru
      _
    // Predicated region
    $region18: #{bottleneck_forward.13} parent=1 // pred_check
      _
    $region19: #{bottleneck_forward.13} parent=1 // pred_check_branch
      %21 = sbr.rel (0) target = $region21
    $region20: #{bottleneck_forward.13} parent=1 // pred_region
      _
    $region21: #{bottleneck_forward.13} parent=1 // pred_fallthru
      _
    // Predicated region
    $region22: #{bottleneck_forward.13} parent=1 // pred_check
      _
    $region23: #{bottleneck_forward.13} parent=1 // pred_check_branch
      %23 = sbr.rel (0) target = $region25
    $region24: #{bottleneck_forward.13} parent=1 // pred_region
      _
    $region25: #{bottleneck_forward.13} parent=1 // pred_fallthru
      _
    %v24 = vld [vmem:[%s0] sm:$0xff]
    %v25 = vld [vmem:[%s0 + $0x8] sm:$0xff]
    %v26 = vld [vmem:[%s0 + $0x10] sm:$0xff]
    %v27 = vld [vmem:[%s0 + $0x18] sm:$0xff]
    %v28 = vld [vmem:[%s0 + $0x20] sm:$0xff]
    %v29 = vld [vmem:[%s0 + $0x28] sm:$0xff]
    %v30 = vld [vmem:[%s0 + $0x30] sm:$0xff]
    %v31 = vld [vmem:[%s0 + $0x38] sm:$0xff]
    %v32 = vld [vmem:[%s0 + $0x40] sm:$0xff]
    %v33 = vld [vmem:[%s0 + $0x48] sm:$0xff]
    %v34 = vld [vmem:[%s0 + $0x50] sm:$0xff]
    %v35 = vld [vmem:[%s0 + $0x58] sm:$0xff]
    %v36 = vld [vmem:[%s0 + $0x60] sm:$0xff]
    %v37 = vld [vmem:[%s0 + $0x68] sm:$0xff]
    %v38 = vld [vmem:[%s0 + $0x70] sm:$0xff]
    %v39 = vld [vmem:[%s0 + $0x78] sm:$0xff]
    %v40 = vld [vmem:[%s1] sm:$0x1]
    %v42 = vperm.slane %v40, 0
    %v44 = vmul.f32 %v24, %v42
    %v45 = vmul.f32 %v25, %v42
    %v46 = vmul.f32 %v26, %v42
    %v47 = vmul.f32 %v27, %v42
    %v48 = vmul.f32 %v28, %v42
    %v49 = vmul.f32 %v29, %v42
    %v50 = vmul.f32 %v30, %v42
    %v51 = vmul.f32 %v31, %v42
    %v52 = vmul.f32 %v32, %v42
    %v53 = vmul.f32 %v33, %v42
    %v54 = vmul.f32 %v34, %v42
    %v55 = vmul.f32 %v35, %v42
    %v56 = vmul.f32 %v36, %v42
    %v57 = vmul.f32 %v37, %v42
    %v58 = vmul.f32 %v38, %v42
    %v59 = vmul.f32 %v39, %v42
    %v60 = vld [vmem:[%s2] sm:$0x1]
    %v62 = vperm.slane %v60, 0
    %v64 = vadd.f32 %v44, %v62
    %v65 = vadd.f32 %v45, %v62
    %v66 = vadd.f32 %v46, %v62
    %v67 = vadd.f32 %v47, %v62
    %v68 = vadd.f32 %v48, %v62
    %v69 = vadd.f32 %v49, %v62
    %v70 = vadd.f32 %v50, %v62
    %v71 = vadd.f32 %v51, %v62
    %v72 = vadd.f32 %v52, %v62
    %v73 = vadd.f32 %v53, %v62
    %v74 = vadd.f32 %v54, %v62
    %v75 = vadd.f32 %v55, %v62
    %v76 = vadd.f32 %v56, %v62
    %v77 = vadd.f32 %v57, %v62
    %v78 = vadd.f32 %v58, %v62
    %v79 = vadd.f32 %v59, %v62
    %v80 = vld [vmem:[%s3] sm:$0xff]
    %v81 = vld [vmem:[%s3 + $0x8] sm:$0xff]
    %v82 = vld [vmem:[%s3 + $0x10] sm:$0xff]
    %v83 = vld [vmem:[%s3 + $0x18] sm:$0xff]
    %v84 = vld [vmem:[%s3 + $0x20] sm:$0xff]
    %v85 = vld [vmem:[%s3 + $0x28] sm:$0xff]
    %v86 = vld [vmem:[%s3 + $0x30] sm:$0xff]
    %v87 = vld [vmem:[%s3 + $0x38] sm:$0xff]
    %v88 = vld [vmem:[%s3 + $0x40] sm:$0xff]
    %v89 = vld [vmem:[%s3 + $0x48] sm:$0xff]
    %v90 = vld [vmem:[%s3 + $0x50] sm:$0xff]
    %v91 = vld [vmem:[%s3 + $0x58] sm:$0xff]
    %v92 = vld [vmem:[%s3 + $0x60] sm:$0xff]
    %v93 = vld [vmem:[%s3 + $0x68] sm:$0xff]
    %v94 = vld [vmem:[%s3 + $0x70] sm:$0xff]
    %v95 = vld [vmem:[%s3 + $0x78] sm:$0xff]
    %v96 = vld [vmem:[%s4] sm:$0x1]
    %v98 = vperm.slane %v96, 0
    %v100 = vmul.f32 %v80, %v98
    %v101 = vmul.f32 %v81, %v98
    %v102 = vmul.f32 %v82, %v98
    %v103 = vmul.f32 %v83, %v98
    %v104 = vmul.f32 %v84, %v98
    %v105 = vmul.f32 %v85, %v98
    %v106 = vmul.f32 %v86, %v98
    %v107 = vmul.f32 %v87, %v98
    %v108 = vmul.f32 %v88, %v98
    %v109 = vmul.f32 %v89, %v98
    %v110 = vmul.f32 %v90, %v98
    %v111 = vmul.f32 %v91, %v98
    %v112 = vmul.f32 %v92, %v98
    %v113 = vmul.f32 %v93, %v98
    %v114 = vmul.f32 %v94, %v98
    %v115 = vmul.f32 %v95, %v98
    %v116 = vld [vmem:[%s5] sm:$0x1]
    %v118 = vperm.slane %v116, 0
    %v120 = vadd.f32 %v100, %v118
    %v121 = vadd.f32 %v101, %v118
    %v122 = vadd.f32 %v102, %v118
    %v123 = vadd.f32 %v103, %v118
    %v124 = vadd.f32 %v104, %v118
    %v125 = vadd.f32 %v105, %v118
    %v126 = vadd.f32 %v106, %v118
    %v127 = vadd.f32 %v107, %v118
    %v128 = vadd.f32 %v108, %v118
    %v129 = vadd.f32 %v109, %v118
    %v130 = vadd.f32 %v110, %v118
    %v131 = vadd.f32 %v111, %v118
    %v132 = vadd.f32 %v112, %v118
    %v133 = vadd.f32 %v113, %v118
    %v134 = vadd.f32 %v114, %v118
    %v135 = vadd.f32 %v115, %v118
    %v136 = vadd.f32 %v64, %v120
    %v137 = vadd.f32 %v65, %v121
    %v138 = vadd.f32 %v66, %v122
    %v139 = vadd.f32 %v67, %v123
    %v140 = vadd.f32 %v68, %v124
    %v141 = vadd.f32 %v69, %v125
    %v142 = vadd.f32 %v70, %v126
    %v143 = vadd.f32 %v71, %v127
    %v144 = vadd.f32 %v72, %v128
    %v145 = vadd.f32 %v73, %v129
    %v146 = vadd.f32 %v74, %v130
    %v147 = vadd.f32 %v75, %v131
    %v148 = vadd.f32 %v76, %v132
    %v149 = vadd.f32 %v77, %v133
    %v150 = vadd.f32 %v78, %v134
    %v151 = vadd.f32 %v79, %v135
    %v152 = vmax.f32 %v136, 0.0
    %v153 = vmax.f32 %v137, 0.0
    %v154 = vmax.f32 %v138, 0.0
    %v155 = vmax.f32 %v139, 0.0
    %v156 = vmax.f32 %v140, 0.0
    %v157 = vmax.f32 %v141, 0.0
    %v158 = vmax.f32 %v142, 0.0
    %v159 = vmax.f32 %v143, 0.0
    %v160 = vmax.f32 %v144, 0.0
    %v161 = vmax.f32 %v145, 0.0
    %v162 = vmax.f32 %v146, 0.0
    %v163 = vmax.f32 %v147, 0.0
    %v164 = vmax.f32 %v148, 0.0
    %v165 = vmax.f32 %v149, 0.0
    %v166 = vmax.f32 %v150, 0.0
    %v167 = vmax.f32 %v151, 0.0
    %168 = vst [vmem:[#allocation2] sm:$0xff] %v152
    %169 = vst [vmem:[#allocation2 + $0x8] sm:$0xff] %v153
    %170 = vst [vmem:[#allocation2 + $0x10] sm:$0xff] %v154
    %171 = vst [vmem:[#allocation2 + $0x18] sm:$0xff] %v155
    %172 = vst [vmem:[#allocation2 + $0x20] sm:$0xff] %v156
    %173 = vst [vmem:[#allocation2 + $0x28] sm:$0xff] %v157
    %174 = vst [vmem:[#allocation2 + $0x30] sm:$0xff] %v158
    %175 = vst [vmem:[#allocation2 + $0x38] sm:$0xff] %v159
    %176 = vst [vmem:[#allocation2 + $0x40] sm:$0xff] %v160
    %177 = vst [vmem:[#allocation2 + $0x48] sm:$0xff] %v161
    %178 = vst [vmem:[#allocation2 + $0x50] sm:$0xff] %v162
    %179 = vst [vmem:[#allocation2 + $0x58] sm:$0xff] %v163
    %180 = vst [vmem:[#allocation2 + $0x60] sm:$0xff] %v164
    %181 = vst [vmem:[#allocation2 + $0x68] sm:$0xff] %v165
    %182 = vst [vmem:[#allocation2 + $0x70] sm:$0xff] %v166
    %183 = vst [vmem:[#allocation2 + $0x78] sm:$0xff] %v167
    // Predicated region
    $region26: #{bottleneck_forward.13} parent=1 // pred_check
      _
    $region27: #{bottleneck_forward.13} parent=1 // pred_check_branch
      %185 = sbr.rel (0) target = $region29
    $region28: #{bottleneck_forward.13} parent=1 // pred_region
      %187 = vsyncadd [#allocation3], 0
      %s188 = sshll.u32 [#allocation2], 4
      %s189 = int_to_ptr.vmem [resolvable:$true] %s188
      %s190 = sshll.u32 %s6, 4
      %s191 = int_to_ptr.hbm [resolvable:$true] %s190
      %196 = dma.vmem_to_hbm [thread:$0]  %s189, 2048, %s191, [#allocation3], 128, 128, 8
    $region29: #{bottleneck_forward.13} parent=1 // pred_fallthru
      _
    // Predicated region
    $region30: #{bottleneck_forward.13} parent=1 // pred_check
      _
    $region31: #{bottleneck_forward.13} parent=1 // pred_check_branch
      %198 = sbr.rel (0) target = $region33
    $region32: #{bottleneck_forward.13} parent=1 // pred_region
      %200 = dma.done [#allocation3], 2048
    $region33: #{bottleneck_forward.13} parent=1 // pred_fallthru
      _
    %201 = vsyncpa [#allocation3], 1

</llo_original>
